<compile_context>
chip_gen: v7x
topology: tpu7x:2x2x1
jax: 0.10.0
libtpu: 0.0.40
codegen_flags: <defaults>
</compile_context>

<pallas_src>
import jax
import jax.numpy as jnp
from jax import lax
from jax.experimental import pallas as pl
from jax.experimental.pallas import tpu as pltpu

ROWS, COLS = 6, 7           # classic connect-4 board
HW = ROWS * COLS            # 42
MARK = 1
INSIDE = 128                # trunk channels
PREPOL = 32                 # policy-head channels (== fc3 output width)
VALC = 3                    # value-head channels
NHEAD = PREPOL + VALC       # 35  fused head channels
KIM2COL = 2 * 9             # 18  im2col patch width
KPOL = PREPOL * COLS        # 224 policy-FC partial columns  (c*COLS + j)
KVAL = VALC * PREPOL        # 96  value-fc3 partial columns  (c*PREPOL + m)
KALL = KPOL + KVAL          # 320
EPS = 1e-5


# ----------------------------------------------------------------------------
# Pallas kernel: one board per grid step.
# ----------------------------------------------------------------------------
def connnet_kernel(patches_ref, w1t_ref, colvec_ref, wcatt_ref,
                   wk_ref, mask_ref, sel_ref, smalls_ref, out_ref):
    def leaky(z):
        return jnp.where(z > 0, z, 0.01 * z)

    def bn(z, g, b):
        # training-mode BatchNorm2d with N=1: per-channel (row) stats over the
        # spatial lanes; one-pass moments + rsqrt (EUP) instead of two passes
        # and a divide.
        m = jnp.mean(z, axis=1, keepdims=True)
        msq = jnp.mean(z * z, axis=1, keepdims=True)
        scale = lax.rsqrt(msq - m * m + EPS) * g
        return z * scale + (b - m * scale)

    cv = colvec_ref[...]                                              # (128, 6)

    # trunk: 3x3 conv (im2col matmul) -> leaky -> bn          aT: (128, HW)
    a = jnp.dot(w1t_ref[...], patches_ref[...],
                preferred_element_type=jnp.float32) + cv[:, 0:1]
    a = bn(leaky(a), cv[:, 1:2], cv[:, 2:3])

    # fused policy+value 1x1 convs -> leaky -> bn             hvT: (35, HW)
    hv = jnp.dot(wcatt_ref[...], a,
                 preferred_element_type=jnp.float32) + cv[:NHEAD, 3:4]
    hv = bn(leaky(hv), cv[:NHEAD, 4:5], cv[:NHEAD, 5:6])

    # Both flattened FC contractions as MXU matmuls:
    #   u[r, k] = sum_hw hv[r, hw] * wk[hw, k]      (all per-channel partials)
    #   block-diagonal mask keeps only the (channel r, k-block r) partials,
    #   selector matmul sums them into output lanes.
    u = jnp.dot(hv, wk_ref[...], preferred_element_type=jnp.float32)    # (35, 320)
    gathered = jnp.dot(u * mask_ref[...], sel_ref[...],
                       preferred_element_type=jnp.float32)              # (35, 128)
    e = jnp.sum(gathered, axis=0, keepdims=True)                        # (1, 128)

    smalls = smalls_ref[...]                                            # (1, 128)
    f = e + smalls                      # lanes 0..6: policy logits, 32..63: fc3+bias

    # value head tail: leaky(fc3) -> fc4
    h = leaky(f[:, PREPOL:2 * PREPOL])                                  # (1, 32)
    value = (jnp.sum(h * smalls[:, 2 * PREPOL:3 * PREPOL],
                     axis=1, keepdims=True)
             + smalls[:, COLS:COLS + 1])                                # (1, 1)

    # single lane-dense output row: policy in lanes [0, COLS), value in lane COLS
    lane = lax.broadcasted_iota(jnp.int32, (1, 128), 1)
    row = jnp.where(lane < COLS, f, 0.0)
    row = jnp.where(lane == COLS, value, row)
    out_ref[...] = row


# ----------------------------------------------------------------------------
# Glue: board -> im2col patches (transposed), parameter packing, pallas_call
# ----------------------------------------------------------------------------
def boards_to_patches(boards, mark=MARK):
    """(B, ROWS*COLS) int boards -> transposed im2col patches (B, 18, HW)."""
    B = boards.shape[0]
    field = boards.reshape(B, ROWS, COLS)
    p0 = (field == mark).astype(jnp.float32)
    p1 = ((field != mark) & (field != 0)).astype(jnp.float32)
    x = jnp.stack([p0, p1], axis=1)                                    # (B,2,R,C)
    xp = jnp.pad(x, ((0, 0), (0, 0), (1, 1), (1, 1)))
    cols = []
    for c in range(2):
        for kh in range(3):
            for kw in range(3):
                cols.append(xp[:, c, kh:kh + ROWS, kw:kw + COLS].reshape(B, HW))
    return jnp.stack(cols, axis=1)                                     # (B,18,HW)


def pack_params(params):
    """Re-layout PyTorch-style parameters into a few lane-dense slabs."""
    # 3x3 conv weight (128, 2, 3, 3) -> (128, 18), column index = c*9 + kh*3 + kw
    w1t = params['w_l1'].reshape(INSIDE, KIM2COL)

    # all per-channel column vectors packed into one (128, 6) slab
    colvec = jnp.zeros((INSIDE, 6), jnp.float32)
    colvec = colvec.at[:, 0].set(params['b_l1'])
    colvec = colvec.at[:, 1].set(params['g1'])
    colvec = colvec.at[:, 2].set(params['be1'])
    colvec = colvec.at[:NHEAD, 3].set(
        jnp.concatenate([params['b_c1'], params['b_c3']]))
    colvec = colvec.at[:NHEAD, 4].set(
        jnp.concatenate([params['g2'], params['g3']]))
    colvec = colvec.at[:NHEAD, 5].set(
        jnp.concatenate([params['be2'], params['be3']]))

    # fused 1x1-conv weight: rows 0..31 = conv1 (policy), rows 32..34 = conv3 (value)
    wcatt = jnp.concatenate([params['w_c1'].reshape(PREPOL, INSIDE),
                             params['w_c3'].reshape(VALC, INSIDE)], axis=0)

    # flattened-FC weights, re-laid out lane-dense so one (35,HW)@(HW,320)
    # matmul produces every per-channel partial contraction:
    #   wk[hw, c*COLS + j]          = w_fc [j, c*HW + hw]
    #   wk[hw, KPOL + c*PREPOL + m] = w_fc3[m, c*HW + hw]
    wkp = params['w_fc'].reshape(COLS, PREPOL, HW).transpose(2, 1, 0).reshape(HW, KPOL)
    wkv = params['w_fc3'].reshape(PREPOL, VALC, HW).transpose(2, 1, 0).reshape(HW, KVAL)
    wk = jnp.concatenate([wkp, wkv], axis=1)                           # (42, 320)

    # block-diagonal mask: head channel r owns k-block r
    r_idx = jnp.arange(NHEAD)[:, None]
    k_idx = jnp.arange(KALL)[None, :]
    mask = (((k_idx < KPOL) & (k_idx // COLS == r_idx)) |
            ((k_idx >= KPOL) &
             ((k_idx - KPOL) // PREPOL == r_idx - PREPOL))).astype(jnp.float32)

    # selector: sums per-channel partials into output lanes
    #   policy logits -> lanes [0, COLS); value-fc3 units -> lanes [32, 64)
    sel = jnp.zeros((KALL, 128), jnp.float32)
    kp = jnp.arange(KPOL)
    sel = sel.at[kp, kp % COLS].set(1.0)
    kv = jnp.arange(KVAL)
    sel = sel.at[KPOL + kv, PREPOL + (kv % PREPOL)].set(1.0)

    # small vectors packed into one lane row:
    #   lanes 0..6 b_fc, lane 7 b_fc4, lanes 32..63 b_fc3, lanes 64..95 w_fc4
    smalls = jnp.zeros((1, 128), jnp.float32)
    smalls = smalls.at[0, 0:COLS].set(params['b_fc'])
    smalls = smalls.at[0, COLS].set(params['b_fc4'][0])
    smalls = smalls.at[0, PREPOL:2 * PREPOL].set(params['b_fc3'])
    smalls = smalls.at[0, 2 * PREPOL:3 * PREPOL].set(params['w_fc4'][0])

    return w1t, colvec, wcatt, wk, mask, sel, smalls


@jax.jit
def connnet_forward_pallas(boards, params):
    """Batched forward: boards (B, ROWS*COLS) -> (policy (B, COLS), value (B, 1))."""
    B = boards.shape[0]
    patches = boards_to_patches(boards)
    w1t, colvec, wcatt, wk, mask, sel, smalls = pack_params(params)

    const = lambda b: (0, 0)           # grid-invariant slabs: DMA'd once, stay resident
    out = pl.pallas_call(
        connnet_kernel,
        out_shape=jax.ShapeDtypeStruct((B, 1, 128), jnp.float32),
        grid=(B,),
        in_specs=[
            pl.BlockSpec((None, KIM2COL, HW), lambda b: (b, 0, 0)),    # per-board patches
            pl.BlockSpec((INSIDE, KIM2COL), const),                    # w1t
            pl.BlockSpec((INSIDE, 6), const),                          # colvec
            pl.BlockSpec((NHEAD, INSIDE), const),                      # wcatt
            pl.BlockSpec((HW, KALL), const),                           # wk
            pl.BlockSpec((NHEAD, KALL), const),                        # mask
            pl.BlockSpec((KALL, 128), const),                          # sel
            pl.BlockSpec((1, 128), const),                             # smalls
        ],
        out_specs=pl.BlockSpec((None, 1, 128), lambda b: (b, 0, 0)),
        compiler_params=pltpu.CompilerParams(
            dimension_semantics=("parallel",)),                        # v7x megacore
    )(patches, w1t, colvec, wcatt, wk, mask, sel, smalls)

    out = out.reshape(B, 128)
    return out[:, :COLS], out[:, COLS:COLS + 1]


# ----------------------------------------------------------------------------
# Pure-JAX single-board reference (NCHW, mirrors the PyTorch forward exactly)
# ----------------------------------------------------------------------------
def connnet_forward_ref(board, params, rows=ROWS, cols=COLS, mark=MARK):
    field = board.reshape(rows, cols)
    p0 = (field == mark).astype(jnp.float32)
    p1 = ((field != mark) & (field != 0)).astype(jnp.float32)
    x = jnp.stack([p0, p1])[None]                                      # (1,2,R,C)

    def conv(x, w, b, pad):
        y = lax.conv_general_dilated(
            x, w, window_strides=(1, 1), padding=[(pad, pad), (pad, pad)],
            dimension_numbers=('NCHW', 'OIHW', 'NCHW'))
        return y + b[None, :, None, None]

    def leaky(z):
        return jnp.where(z > 0, z, 0.01 * z)

    def bn(z, g, b):
        mean = jnp.mean(z, axis=(0, 2, 3), keepdims=True)
        var = jnp.mean((z - mean) ** 2, axis=(0, 2, 3), keepdims=True)
        return ((z - mean) / jnp.sqrt(var + EPS)
                * g[None, :, None, None] + b[None, :, None, None])

    a = bn(leaky(conv(x, params['w_l1'], params['b_l1'], 1)),
           params['g1'], params['be1'])

    v = bn(leaky(conv(a, params['w_c3'], params['b_c3'], 0)),
           params['g3'], params['be3'])
    vf = v.reshape(v.shape[0], -1)
    h = leaky(vf @ params['w_fc3'].T + params['b_fc3'])
    value = h @ params['w_fc4'].T + params['b_fc4']

    p = bn(leaky(conv(a, params['w_c1'], params['b_c1'], 0)),
           params['g2'], params['be2'])
    pf = p.reshape(p.shape[0], -1)
    policy = pf @ params['w_fc'].T + params['b_fc']
    return policy, value


# ----------------------------------------------------------------------------
def make_params(key, rows=ROWS, cols=COLS):
    hw = rows * cols
    ks = jax.random.split(key, 20)
    r = lambda k, s, scale=0.1: scale * jax.random.normal(k, s, jnp.float32)
    return {
        'w_l1': r(ks[0], (INSIDE, 2, 3, 3)), 'b_l1': r(ks[1], (INSIDE,)),
        'g1': 1.0 + r(ks[2], (INSIDE,)), 'be1': r(ks[3], (INSIDE,)),
        'w_c3': r(ks[4], (VALC, INSIDE, 1, 1)), 'b_c3': r(ks[5], (VALC,)),
        'g3': 1.0 + r(ks[6], (VALC,)), 'be3': r(ks[7], (VALC,)),
        'w_fc3': r(ks[8], (32, VALC * hw)), 'b_fc3': r(ks[9], (32,)),
        'w_fc4': r(ks[10], (1, 32)), 'b_fc4': r(ks[11], (1,)),
        'w_c1': r(ks[12], (PREPOL, INSIDE, 1, 1)), 'b_c1': r(ks[13], (PREPOL,)),
        'g2': 1.0 + r(ks[14], (PREPOL,)), 'be2': r(ks[15], (PREPOL,)),
        'w_fc': r(ks[16], (cols, PREPOL * hw)), 'b_fc': r(ks[17], (cols,)),
    }


if __name__ == "__main__":
    key = jax.random.PRNGKey(0)
    kp, kb = jax.random.split(key)
    params = make_params(kp)

    B = 8   # boards per pallas_call (amortizes launch / weight DMAs)
    boards = jax.random.randint(kb, (B, ROWS * COLS), 0, 3, dtype=jnp.int32)

    policy, value = connnet_forward_pallas(boards, params)
    jax.block_until_ready((policy, value))
    assert policy.shape == (B, COLS) and value.shape == (B, 1)

    pol_ref, val_ref = [], []
    for b in range(B):
        p_r, v_r = connnet_forward_ref(boards[b], params)
        pol_ref.append(p_r[0])
        val_ref.append(v_r[0])
    pol_ref = jnp.stack(pol_ref)                                       # (B, COLS)
    val_ref = jnp.stack(val_ref)                                       # (B, 1)

    assert jnp.allclose(policy, pol_ref, rtol=5e-3, atol=5e-3), (policy, pol_ref)
    assert jnp.allclose(value, val_ref, rtol=5e-3, atol=5e-3), (value, val_ref)

    print("KERNEL_OK")
</pallas_src>

<mosaic_0001>
module attributes {stable_mosaic.version = 11 : i64} {
  func.func @connnet_kernel(%arg0: i32, %arg1: memref<1x18x42xf32, #tpu.memory_space<vmem>>, %arg2: memref<128x18xf32, #tpu.memory_space<vmem>>, %arg3: memref<128x6xf32, #tpu.memory_space<vmem>>, %arg4: memref<35x128xf32, #tpu.memory_space<vmem>>, %arg5: memref<42x320xf32, #tpu.memory_space<vmem>>, %arg6: memref<35x320xf32, #tpu.memory_space<vmem>>, %arg7: memref<320x128xf32, #tpu.memory_space<vmem>>, %arg8: memref<1x128xf32, #tpu.memory_space<vmem>>, %arg9: memref<1x1x128xf32, #tpu.memory_space<vmem>>) attributes {dimension_semantics = [#tpu.dimension_semantics<parallel>], iteration_bounds = array<i64: 8>, scalar_prefetch = 0 : i64, scratch_operands = 0 : i64, tpu.core_type = #tpu.core_type<tc>, window_params = [{transform_indices = @transform_0, window_bounds = array<i64: 1, 18, 42>}, {pipeline_mode = #tpu.pipeline_mode<synchronous>, transform_indices = @transform_1, window_bounds = array<i64: 128, 18>}, {pipeline_mode = #tpu.pipeline_mode<synchronous>, transform_indices = @transform_2, window_bounds = array<i64: 128, 6>}, {pipeline_mode = #tpu.pipeline_mode<synchronous>, transform_indices = @transform_3, window_bounds = array<i64: 35, 128>}, {pipeline_mode = #tpu.pipeline_mode<synchronous>, transform_indices = @transform_4, window_bounds = array<i64: 42, 320>}, {pipeline_mode = #tpu.pipeline_mode<synchronous>, transform_indices = @transform_5, window_bounds = array<i64: 35, 320>}, {pipeline_mode = #tpu.pipeline_mode<synchronous>, transform_indices = @transform_6, window_bounds = array<i64: 320, 128>}, {pipeline_mode = #tpu.pipeline_mode<synchronous>, transform_indices = @transform_7, window_bounds = array<i64: 1, 128>}, {transform_indices = @transform_8, window_bounds = array<i64: 1, 1, 128>}]} {
    %c0 = arith.constant 0 : index
    %c0_0 = arith.constant 0 : index
    %0 = vector.load %arg3[%c0, %c0_0] : memref<128x6xf32, #tpu.memory_space<vmem>>, vector<128x6xf32>
    %c0_1 = arith.constant 0 : index
    %c0_2 = arith.constant 0 : index
    %1 = vector.load %arg2[%c0_1, %c0_2] : memref<128x18xf32, #tpu.memory_space<vmem>>, vector<128x18xf32>
    %c0_3 = arith.constant 0 : index
    %c0_4 = arith.constant 0 : index
    %c0_5 = arith.constant 0 : index
    %2 = vector.load %arg1[%c0_3, %c0_4, %c0_5] : memref<1x18x42xf32, #tpu.memory_space<vmem>>, vector<1x18x42xf32>
    %3 = vector.shape_cast %2 : vector<1x18x42xf32> to vector<18x42xf32>
    %cst = arith.constant dense<0.000000e+00> : vector<128x42xf32>
    %4 = tpu.matmul %1, %3, %cst {dimension_numbers = #tpu.dot_dimension_numbers<[1], [0], [0], [1], [0, 0, 1, 1], [], []>} : vector<128x18xf32>, vector<18x42xf32>, vector<128x42xf32> -> vector<128x42xf32>
    %5 = vector.extract_strided_slice %0 {offsets = [0, 0], sizes = [128, 1], strides = [1, 1]} : vector<128x6xf32> to vector<128x1xf32>
    %6 = vector.broadcast %5 : vector<128x1xf32> to vector<128x42xf32>
    %7 = arith.addf %4, %6 : vector<128x42xf32>
    %cst_6 = arith.constant 0.000000e+00 : f32
    %8 = vector.broadcast %cst_6 : f32 to vector<128x42xf32>
    %9 = arith.cmpf ogt, %7, %8 : vector<128x42xf32>
    %cst_7 = arith.constant 0.00999999977 : f32
    %10 = vector.broadcast %cst_7 : f32 to vector<128x42xf32>
    %11 = arith.mulf %10, %7 : vector<128x42xf32>
    %12 = arith.select %9, %7, %11 : vector<128x42xi1>, vector<128x42xf32>
    %13 = vector.extract_strided_slice %0 {offsets = [0, 1], sizes = [128, 1], strides = [1, 1]} : vector<128x6xf32> to vector<128x1xf32>
    %14 = vector.extract_strided_slice %0 {offsets = [0, 2], sizes = [128, 1], strides = [1, 1]} : vector<128x6xf32> to vector<128x1xf32>
    %cst_8 = arith.constant dense<0.000000e+00> : vector<128xf32>
    %15 = vector.multi_reduction <add>, %12, %cst_8 [1] : vector<128x42xf32> to vector<128xf32>
    %16 = vector.shape_cast %15 : vector<128xf32> to vector<128x1xf32>
    %cst_9 = arith.constant 4.200000e+01 : f32
    %17 = vector.broadcast %cst_9 : f32 to vector<128x1xf32>
    %18 = arith.divf %16, %17 : vector<128x1xf32>
    %19 = arith.mulf %12, %12 : vector<128x42xf32>
    %cst_10 = arith.constant dense<0.000000e+00> : vector<128xf32>
    %20 = vector.multi_reduction <add>, %19, %cst_10 [1] : vector<128x42xf32> to vector<128xf32>
    %21 = vector.shape_cast %20 : vector<128xf32> to vector<128x1xf32>
    %cst_11 = arith.constant 4.200000e+01 : f32
    %22 = vector.broadcast %cst_11 : f32 to vector<128x1xf32>
    %23 = arith.divf %21, %22 : vector<128x1xf32>
    %24 = arith.mulf %18, %18 : vector<128x1xf32>
    %25 = arith.subf %23, %24 : vector<128x1xf32>
    %cst_12 = arith.constant 9.99999974E-6 : f32
    %26 = vector.broadcast %cst_12 : f32 to vector<128x1xf32>
    %27 = arith.addf %25, %26 : vector<128x1xf32>
    %28 = math.rsqrt %27 : vector<128x1xf32>
    %29 = arith.mulf %28, %13 : vector<128x1xf32>
    %30 = vector.broadcast %29 : vector<128x1xf32> to vector<128x42xf32>
    %31 = arith.mulf %12, %30 : vector<128x42xf32>
    %32 = arith.mulf %18, %29 : vector<128x1xf32>
    %33 = arith.subf %14, %32 : vector<128x1xf32>
    %34 = vector.broadcast %33 : vector<128x1xf32> to vector<128x42xf32>
    %35 = arith.addf %31, %34 : vector<128x42xf32>
    %c0_13 = arith.constant 0 : index
    %c0_14 = arith.constant 0 : index
    %36 = vector.load %arg4[%c0_13, %c0_14] : memref<35x128xf32, #tpu.memory_space<vmem>>, vector<35x128xf32>
    %cst_15 = arith.constant dense<0.000000e+00> : vector<35x42xf32>
    %37 = tpu.matmul %36, %35, %cst_15 {dimension_numbers = #tpu.dot_dimension_numbers<[1], [0], [0], [1], [0, 0, 1, 1], [], []>} : vector<35x128xf32>, vector<128x42xf32>, vector<35x42xf32> -> vector<35x42xf32>
    %38 = vector.extract_strided_slice %0 {offsets = [0, 3], sizes = [35, 1], strides = [1, 1]} : vector<128x6xf32> to vector<35x1xf32>
    %39 = vector.broadcast %38 : vector<35x1xf32> to vector<35x42xf32>
    %40 = arith.addf %37, %39 : vector<35x42xf32>
    %cst_16 = arith.constant 0.000000e+00 : f32
    %41 = vector.broadcast %cst_16 : f32 to vector<35x42xf32>
    %42 = arith.cmpf ogt, %40, %41 : vector<35x42xf32>
    %cst_17 = arith.constant 0.00999999977 : f32
    %43 = vector.broadcast %cst_17 : f32 to vector<35x42xf32>
    %44 = arith.mulf %43, %40 : vector<35x42xf32>
    %45 = arith.select %42, %40, %44 : vector<35x42xi1>, vector<35x42xf32>
    %46 = vector.extract_strided_slice %0 {offsets = [0, 4], sizes = [35, 1], strides = [1, 1]} : vector<128x6xf32> to vector<35x1xf32>
    %47 = vector.extract_strided_slice %0 {offsets = [0, 5], sizes = [35, 1], strides = [1, 1]} : vector<128x6xf32> to vector<35x1xf32>
    %cst_18 = arith.constant dense<0.000000e+00> : vector<35xf32>
    %48 = vector.multi_reduction <add>, %45, %cst_18 [1] : vector<35x42xf32> to vector<35xf32>
    %49 = vector.shape_cast %48 : vector<35xf32> to vector<35x1xf32>
    %cst_19 = arith.constant 4.200000e+01 : f32
    %50 = vector.broadcast %cst_19 : f32 to vector<35x1xf32>
    %51 = arith.divf %49, %50 : vector<35x1xf32>
    %52 = arith.mulf %45, %45 : vector<35x42xf32>
    %cst_20 = arith.constant dense<0.000000e+00> : vector<35xf32>
    %53 = vector.multi_reduction <add>, %52, %cst_20 [1] : vector<35x42xf32> to vector<35xf32>
    %54 = vector.shape_cast %53 : vector<35xf32> to vector<35x1xf32>
    %cst_21 = arith.constant 4.200000e+01 : f32
    %55 = vector.broadcast %cst_21 : f32 to vector<35x1xf32>
    %56 = arith.divf %54, %55 : vector<35x1xf32>
    %57 = arith.mulf %51, %51 : vector<35x1xf32>
    %58 = arith.subf %56, %57 : vector<35x1xf32>
    %cst_22 = arith.constant 9.99999974E-6 : f32
    %59 = vector.broadcast %cst_22 : f32 to vector<35x1xf32>
    %60 = arith.addf %58, %59 : vector<35x1xf32>
    %61 = math.rsqrt %60 : vector<35x1xf32>
    %62 = arith.mulf %61, %46 : vector<35x1xf32>
    %63 = vector.broadcast %62 : vector<35x1xf32> to vector<35x42xf32>
    %64 = arith.mulf %45, %63 : vector<35x42xf32>
    %65 = arith.mulf %51, %62 : vector<35x1xf32>
    %66 = arith.subf %47, %65 : vector<35x1xf32>
    %67 = vector.broadcast %66 : vector<35x1xf32> to vector<35x42xf32>
    %68 = arith.addf %64, %67 : vector<35x42xf32>
    %c0_23 = arith.constant 0 : index
    %c0_24 = arith.constant 0 : index
    %69 = vector.load %arg5[%c0_23, %c0_24] : memref<42x320xf32, #tpu.memory_space<vmem>>, vector<42x320xf32>
    %cst_25 = arith.constant dense<0.000000e+00> : vector<35x320xf32>
    %70 = tpu.matmul %68, %69, %cst_25 {dimension_numbers = #tpu.dot_dimension_numbers<[1], [0], [0], [1], [0, 0, 1, 1], [], []>} : vector<35x42xf32>, vector<42x320xf32>, vector<35x320xf32> -> vector<35x320xf32>
    %c0_26 = arith.constant 0 : index
    %c0_27 = arith.constant 0 : index
    %71 = vector.load %arg6[%c0_26, %c0_27] : memref<35x320xf32, #tpu.memory_space<vmem>>, vector<35x320xf32>
    %72 = arith.mulf %70, %71 : vector<35x320xf32>
    %c0_28 = arith.constant 0 : index
    %c0_29 = arith.constant 0 : index
    %73 = vector.load %arg7[%c0_28, %c0_29] : memref<320x128xf32, #tpu.memory_space<vmem>>, vector<320x128xf32>
    %cst_30 = arith.constant dense<0.000000e+00> : vector<35x128xf32>
    %74 = tpu.matmul %72, %73, %cst_30 {dimension_numbers = #tpu.dot_dimension_numbers<[1], [0], [0], [1], [0, 0, 1, 1], [], []>} : vector<35x320xf32>, vector<320x128xf32>, vector<35x128xf32> -> vector<35x128xf32>
    %cst_31 = arith.constant dense<0.000000e+00> : vector<128xf32>
    %75 = vector.multi_reduction <add>, %74, %cst_31 [0] : vector<35x128xf32> to vector<128xf32>
    %76 = vector.shape_cast %75 : vector<128xf32> to vector<1x128xf32>
    %c0_32 = arith.constant 0 : index
    %c0_33 = arith.constant 0 : index
    %77 = vector.load %arg8[%c0_32, %c0_33] : memref<1x128xf32, #tpu.memory_space<vmem>>, vector<1x128xf32>
    %78 = arith.addf %76, %77 : vector<1x128xf32>
    %79 = vector.extract_strided_slice %78 {offsets = [0, 32], sizes = [1, 32], strides = [1, 1]} : vector<1x128xf32> to vector<1x32xf32>
    %cst_34 = arith.constant 0.000000e+00 : f32
    %80 = vector.broadcast %cst_34 : f32 to vector<1x32xf32>
    %81 = arith.cmpf ogt, %79, %80 : vector<1x32xf32>
    %cst_35 = arith.constant 0.00999999977 : f32
    %82 = vector.broadcast %cst_35 : f32 to vector<1x32xf32>
    %83 = arith.mulf %82, %79 : vector<1x32xf32>
    %84 = arith.select %81, %79, %83 : vector<1x32xi1>, vector<1x32xf32>
    %85 = vector.extract_strided_slice %77 {offsets = [0, 64], sizes = [1, 32], strides = [1, 1]} : vector<1x128xf32> to vector<1x32xf32>
    %86 = arith.mulf %84, %85 : vector<1x32xf32>
    %cst_36 = arith.constant dense<0.000000e+00> : vector<1xf32>
    %87 = vector.multi_reduction <add>, %86, %cst_36 [1] : vector<1x32xf32> to vector<1xf32>
    %88 = vector.shape_cast %87 : vector<1xf32> to vector<1x1xf32>
    %89 = vector.extract_strided_slice %77 {offsets = [0, 7], sizes = [1, 1], strides = [1, 1]} : vector<1x128xf32> to vector<1x1xf32>
    %90 = arith.addf %88, %89 : vector<1x1xf32>
    %91 = tpu.iota {dimensions = array<i32: 1>} : vector<1x128xi32>
    %c7_i32 = arith.constant 7 : i32
    %92 = vector.broadcast %c7_i32 : i32 to vector<1x128xi32>
    %93 = arith.cmpi slt, %91, %92 : vector<1x128xi32>
    %cst_37 = arith.constant 0.000000e+00 : f32
    %94 = vector.broadcast %cst_37 : f32 to vector<1x128xf32>
    %95 = arith.select %93, %78, %94 : vector<1x128xi1>, vector<1x128xf32>
    %c7_i32_38 = arith.constant 7 : i32
    %96 = vector.broadcast %c7_i32_38 : i32 to vector<1x128xi32>
    %97 = arith.cmpi eq, %91, %96 : vector<1x128xi32>
    %98 = vector.shape_cast %90 : vector<1x1xf32> to vector<1x1xf32>
    %99 = vector.broadcast %98 : vector<1x1xf32> to vector<1x128xf32>
    %100 = arith.select %97, %99, %95 : vector<1x128xi1>, vector<1x128xf32>
    %c0_39 = arith.constant 0 : index
    %c0_40 = arith.constant 0 : index
    %c0_41 = arith.constant 0 : index
    %101 = vector.load %arg9[%c0_39, %c0_40, %c0_41] : memref<1x1x128xf32, #tpu.memory_space<vmem>>, vector<1x1x128xf32>
    %102 = vector.shape_cast %101 : vector<1x1x128xf32> to vector<1x128xf32>
    %103 = vector.shape_cast %100 : vector<1x128xf32> to vector<1x1x128xf32>
    tpu.vector_store %arg9[%c0_39, %c0_40, %c0_41], %103 {strides = array<i32>} : memref<1x1x128xf32, #tpu.memory_space<vmem>>, vector<1x1x128xf32>,
    return
  }
  func.func @transform_0(%arg0: i32) -> (i32, i32, i32) {
    %c0_i32 = arith.constant 0 : i32
    %c0_i32_0 = arith.constant 0 : i32
    %c0_i32_1 = arith.constant 0 : i32
    return %arg0, %c0_i32, %c0_i32_0 : i32, i32, i32
  }
  func.func @transform_1(%arg0: i32) -> (i32, i32) {
    %c0_i32 = arith.constant 0 : i32
    %c0_i32_0 = arith.constant 0 : i32
    %c0_i32_1 = arith.constant 0 : i32
    return %c0_i32, %c0_i32_0 : i32, i32
  }
  func.func @transform_2(%arg0: i32) -> (i32, i32) {
    %c0_i32 = arith.constant 0 : i32
    %c0_i32_0 = arith.constant 0 : i32
    %c0_i32_1 = arith.constant 0 : i32
    return %c0_i32, %c0_i32_0 : i32, i32
  }
  func.func @transform_3(%arg0: i32) -> (i32, i32) {
    %c0_i32 = arith.constant 0 : i32
    %c0_i32_0 = arith.constant 0 : i32
    %c0_i32_1 = arith.constant 0 : i32
    return %c0_i32, %c0_i32_0 : i32, i32
  }
  func.func @transform_4(%arg0: i32) -> (i32, i32) {
    %c0_i32 = arith.constant 0 : i32
    %c0_i32_0 = arith.constant 0 : i32
    %c0_i32_1 = arith.constant 0 : i32
    return %c0_i32, %c0_i32_0 : i32, i32
  }
  func.func @transform_5(%arg0: i32) -> (i32, i32) {
    %c0_i32 = arith.constant 0 : i32
    %c0_i32_0 = arith.constant 0 : i32
    %c0_i32_1 = arith.constant 0 : i32
    return %c0_i32, %c0_i32_0 : i32, i32
  }
  func.func @transform_6(%arg0: i32) -> (i32, i32) {
    %c0_i32 = arith.constant 0 : i32
    %c0_i32_0 = arith.constant 0 : i32
    %c0_i32_1 = arith.constant 0 : i32
    return %c0_i32, %c0_i32_0 : i32, i32
  }
  func.func @transform_7(%arg0: i32) -> (i32, i32) {
    %c0_i32 = arith.constant 0 : i32
    %c0_i32_0 = arith.constant 0 : i32
    %c0_i32_1 = arith.constant 0 : i32
    return %c0_i32, %c0_i32_0 : i32, i32
  }
  func.func @transform_8(%arg0: i32) -> (i32, i32, i32) {
    %c0_i32 = arith.constant 0 : i32
    %c0_i32_0 = arith.constant 0 : i32
    %c0_i32_1 = arith.constant 0 : i32
    return %arg0, %c0_i32, %c0_i32_0 : i32, i32, i32
  }
}

</mosaic_0001>

<llo_original>
// kernel: squeeze.20
$region0: #{squeeze.20}
  %s0 = inlined_call_operand.vmem [shape: f32[8,1,6,7], index: 0, kind: input, shape index: {}]
  %s1 = inlined_call_operand.vmem [shape: f32[8,1,42], index: 1, kind: output, shape index: {}]
  %v2 = vld [vmem:[%s0] ss:$8 sm:$0xf]
  %v3 = vld [vmem:[%s0] ss:$8 sm:$0xf0]
  %vm4 = vcmask 1047556
  %v5 = vsel %vm4, %v3, %v2
  %vm6 = vcmask 56320
  %7 = vst.msk [vmem:[%s1] sm:$0xff] %vm6, %v5
  %s8 = scalar_lea.vmem %s0, 5
  %v9 = vld [vmem:[%s8] ss:$8 sm:$0xf]
  %s10 = scalar_lea.vmem %s0, 5
  %v11 = vld [vmem:[%s10] ss:$8 sm:$0xf0]
  %vm12 = vcmask 1047556
  %v13 = vsel %vm12, %v11, %v9
  %14 = vrot.lane.b32.xlu0 %v13, 35
  %v15 = vpop.permute.xlu0 %14
  %vm16 = vcmask 343320
  %17 = vst.msk [vmem:[%s1] sm:$0xff] %vm16, %v15
  %s18 = scalar_lea.vmem %s0, 4
  %v19 = vld [vmem:[%s18] ss:$8 sm:$0xf]
  %s20 = scalar_lea.vmem %s0, 4
  %v21 = vld [vmem:[%s20] ss:$8 sm:$0xf0]
  %vm22 = vcmask 1047556
  %v23 = vsel %vm22, %v21, %v19
  %24 = vrot.lane.b32.xlu0 %v23, 28
  %v25 = vpop.permute.xlu0 %24
  %vm26 = vcmask 285920
  %27 = vst.msk [vmem:[%s1] sm:$0xff] %vm26, %v25
  %s28 = scalar_lea.vmem %s0, 3
  %v29 = vld [vmem:[%s28] ss:$8 sm:$0xf]
  %s30 = scalar_lea.vmem %s0, 3
  %v31 = vld [vmem:[%s30] ss:$8 sm:$0xf0]
  %vm32 = vcmask 1047556
  %v33 = vsel %vm32, %v31, %v29
  %34 = vrot.lane.b32.xlu0 %v33, 21
  %v35 = vpop.permute.xlu0 %34
  %vm36 = vcmask 228520
  %37 = vst.msk [vmem:[%s1] sm:$0xff] %vm36, %v35
  %s38 = scalar_lea.vmem %s0, 2
  %v39 = vld [vmem:[%s38] ss:$8 sm:$0xf]
  %s40 = scalar_lea.vmem %s0, 2
  %v41 = vld [vmem:[%s40] ss:$8 sm:$0xf0]
  %vm42 = vcmask 1047556
  %v43 = vsel %vm42, %v41, %v39
  %44 = vrot.lane.b32.xlu0 %v43, 14
  %v45 = vpop.permute.xlu0 %44
  %vm46 = vcmask 171120
  %47 = vst.msk [vmem:[%s1] sm:$0xff] %vm46, %v45
  %s48 = scalar_lea.vmem %s0, 1
  %v49 = vld [vmem:[%s48] ss:$8 sm:$0xf]
  %s50 = scalar_lea.vmem %s0, 1
  %v51 = vld [vmem:[%s50] ss:$8 sm:$0xf0]
  %vm52 = vcmask 1047556
  %v53 = vsel %vm52, %v51, %v49
  %54 = vrot.lane.b32.xlu0 %v53, 7
  %v55 = vpop.permute.xlu0 %54
  %vm56 = vcmask 113720
  %57 = vst.msk [vmem:[%s1] sm:$0xff] %vm56, %v55

// kernel: connnet_forward_pallas.1
$region0: #{connnet_forward_pallas.1}
  #allocation0 [shape = 'u32[]', space=smem, size = 0x4, offset = 0x4, fixed_abs, tag = 'smem constant byte address 0x4 - core index']
  #allocation1 [shape = 'u32[144,128]{1,0:T(1,128)}', space=vmem, size = 0x12000, scoped, tag = 'internal scratch']
  %s0 = inlined_call_operand.vmem [shape: f32[8,18,42], index: 0, kind: input, shape index: {}]
  %s1 = inlined_call_operand.vmem [shape: f32[128,18], index: 1, kind: input, shape index: {}]
  %s2 = inlined_call_operand.vmem [shape: f32[128,6], index: 2, kind: input, shape index: {}]
  %s3 = inlined_call_operand.vmem [shape: f32[35,128], index: 3, kind: input, shape index: {}]
  %s4 = inlined_call_operand.vmem [shape: f32[42,320], index: 4, kind: input, shape index: {}]
  %s5 = inlined_call_operand.vmem [shape: f32[35,320], index: 5, kind: input, shape index: {}]
  %s6 = inlined_call_operand.vmem [shape: f32[320,128], index: 6, kind: input, shape index: {}]
  %s7 = inlined_call_operand.vmem [shape: f32[1,128], index: 7, kind: input, shape index: {}]
  %s8 = inlined_call_operand.vmem [shape: f32[8,1,128], index: 8, kind: output, shape index: {}]
  %s9 = sld [smem:[#allocation0]]
  $region65: #{connnet_forward_pallas.1} parent=0
    _
  %s11 = ssub.s32 1, %s9
  %s12 = scalar_select 0, %s11, %s9
  loop: start=0, step=1, limit=10
  $region2: #{connnet_forward_pallas.1} parent=0 // loop_pre_header
    _
  $region3: #{connnet_forward_pallas.1} parent=0 // loop_header
    %s14 = sphi 0, %s18
    %p15 = scmp.ge.s32.totalorder %s14, 10
    %s24 = sphi 0, %s26
    %s27 = sphi 0, %s24
    %s28 = sphi 0, %s27
    %s44 = sphi 0, %s28
    %s48 = sphi 0, %s48
    %s50 = sphi 0, %s48
    %s51 = sphi 0, %s50
    %s65 = sphi 0, %s51
    %s69 = sphi 0, %s69
    %s71 = sphi 0, %s69
    %s72 = sphi 0, %s71
    %s86 = sphi 0, %s72
    %s90 = sphi 0, %s90
    %s92 = sphi 0, %s90
    %s93 = sphi 0, %s92
    %s107 = sphi 0, %s93
    %s111 = sphi 0, %s111
    %s113 = sphi 0, %s111
    %s114 = sphi 0, %s113
    %s128 = sphi 0, %s114
    %s132 = sphi 0, %s132
    %s134 = sphi 0, %s132
    %s135 = sphi 0, %s134
    %s149 = sphi 0, %s135
    %s153 = sphi 0, %s153
    %s155 = sphi 0, %s153
    %s156 = sphi 0, %s155
    %s170 = sphi 0, %s156
    %s174 = sphi 0, %s174
    %s176 = sphi 0, %s174
    %s177 = sphi 0, %s176
    %s191 = sphi 0, %s177
    %s197 = sphi 0, %s199
    %s200 = sphi 0, %s197
    %s201 = sphi 0, %s200
    %s217 = sphi 0, %s201
  $region4: #{connnet_forward_pallas.1} parent=0 // loop_header_branch
    %17 = sbr.rel (%p15) target = $region8
  $region5: #{connnet_forward_pallas.1} parent=0 // loop_body
    %s19 = ssub.s32 %s14, 1
    %s20 = ssub.s32 %s14, 2
    %s21 = sadd.s32 %s14, 1
    %s22 = ssub.s32 %s14, %s21
    %p23 = scmp.eq.s32.totalorder %s22, 0
    %s25 = sadd.s32 %s24, 1
    %s26 = scalar_select %p23, %s24, %s25
    %p29 = pneg %p23
    %p30 = scmp.eq.s32.totalorder %s14, 7
    %p31 = por %p29, %p30
    %p32 = scmp.ne.s32.totalorder %s24, %s27
    %p33 = scmp.eq.s32.totalorder %s14, 0
    %p34 = por %p32, %p33
    %p35 = scmp.ne.s32.totalorder %s24, %s27
    %p36 = scmp.eq.s32.totalorder %s19, 7
    %p37 = por %p35, %p36
    %p38 = scmp.ne.s32.totalorder %s27, %s28
    %p39 = scmp.eq.s32.totalorder %s19, 0
    %p40 = por %p38, %p39
    %p41 = scmp.ne.s32.totalorder %s27, %s28
    %p42 = scmp.eq.s32.totalorder %s20, 7
    %p43 = por %p41, %p42
    %p45 = scmp.ne.s32.totalorder %s28, %s44
    %p46 = scmp.eq.s32.totalorder %s20, 0
    %p47 = por %p45, %p46
    %s49 = sadd.s32 %s48, 1
    %p52 = scmp.eq.s32.totalorder %s14, 7
    %p53 = scmp.ne.s32.totalorder %s48, %s50
    %p54 = scmp.eq.s32.totalorder %s14, 0
    %p55 = por %p53, %p54
    %p56 = scmp.ne.s32.totalorder %s48, %s50
    %p57 = scmp.eq.s32.totalorder %s19, 7
    %p58 = por %p56, %p57
    %p59 = scmp.ne.s32.totalorder %s50, %s51
    %p60 = scmp.eq.s32.totalorder %s19, 0
    %p61 = por %p59, %p60
    %p62 = scmp.ne.s32.totalorder %s50, %s51
    %p63 = scmp.eq.s32.totalorder %s20, 7
    %p64 = por %p62, %p63
    %p66 = scmp.ne.s32.totalorder %s51, %s65
    %p67 = scmp.eq.s32.totalorder %s20, 0
    %p68 = por %p66, %p67
    %s70 = sadd.s32 %s69, 1
    %p73 = scmp.eq.s32.totalorder %s14, 7
    %p74 = scmp.ne.s32.totalorder %s69, %s71
    %p75 = scmp.eq.s32.totalorder %s14, 0
    %p76 = por %p74, %p75
    %p77 = scmp.ne.s32.totalorder %s69, %s71
    %p78 = scmp.eq.s32.totalorder %s19, 7
    %p79 = por %p77, %p78
    %p80 = scmp.ne.s32.totalorder %s71, %s72
    %p81 = scmp.eq.s32.totalorder %s19, 0
    %p82 = por %p80, %p81
    %p83 = scmp.ne.s32.totalorder %s71, %s72
    %p84 = scmp.eq.s32.totalorder %s20, 7
    %p85 = por %p83, %p84
    %p87 = scmp.ne.s32.totalorder %s72, %s86
    %p88 = scmp.eq.s32.totalorder %s20, 0
    %p89 = por %p87, %p88
    %s91 = sadd.s32 %s90, 1
    %p94 = scmp.eq.s32.totalorder %s14, 7
    %p95 = scmp.ne.s32.totalorder %s90, %s92
    %p96 = scmp.eq.s32.totalorder %s14, 0
    %p97 = por %p95, %p96
    %p98 = scmp.ne.s32.totalorder %s90, %s92
    %p99 = scmp.eq.s32.totalorder %s19, 7
    %p100 = por %p98, %p99
    %p101 = scmp.ne.s32.totalorder %s92, %s93
    %p102 = scmp.eq.s32.totalorder %s19, 0
    %p103 = por %p101, %p102
    %p104 = scmp.ne.s32.totalorder %s92, %s93
    %p105 = scmp.eq.s32.totalorder %s20, 7
    %p106 = por %p104, %p105
    %p108 = scmp.ne.s32.totalorder %s93, %s107
    %p109 = scmp.eq.s32.totalorder %s20, 0
    %p110 = por %p108, %p109
    %s112 = sadd.s32 %s111, 1
    %p115 = scmp.eq.s32.totalorder %s14, 7
    %p116 = scmp.ne.s32.totalorder %s111, %s113
    %p117 = scmp.eq.s32.totalorder %s14, 0
    %p118 = por %p116, %p117
    %p119 = scmp.ne.s32.totalorder %s111, %s113
    %p120 = scmp.eq.s32.totalorder %s19, 7
    %p121 = por %p119, %p120
    %p122 = scmp.ne.s32.totalorder %s113, %s114
    %p123 = scmp.eq.s32.totalorder %s19, 0
    %p124 = por %p122, %p123
    %p125 = scmp.ne.s32.totalorder %s113, %s114
    %p126 = scmp.eq.s32.totalorder %s20, 7
    %p127 = por %p125, %p126
    %p129 = scmp.ne.s32.totalorder %s114, %s128
    %p130 = scmp.eq.s32.totalorder %s20, 0
    %p131 = por %p129, %p130
    %s133 = sadd.s32 %s132, 1
    %p136 = scmp.eq.s32.totalorder %s14, 7
    %p137 = scmp.ne.s32.totalorder %s132, %s134
    %p138 = scmp.eq.s32.totalorder %s14, 0
    %p139 = por %p137, %p138
    %p140 = scmp.ne.s32.totalorder %s132, %s134
    %p141 = scmp.eq.s32.totalorder %s19, 7
    %p142 = por %p140, %p141
    %p143 = scmp.ne.s32.totalorder %s134, %s135
    %p144 = scmp.eq.s32.totalorder %s19, 0
    %p145 = por %p143, %p144
    %p146 = scmp.ne.s32.totalorder %s134, %s135
    %p147 = scmp.eq.s32.totalorder %s20, 7
    %p148 = por %p146, %p147
    %p150 = scmp.ne.s32.totalorder %s135, %s149
    %p151 = scmp.eq.s32.totalorder %s20, 0
    %p152 = por %p150, %p151
    %s154 = sadd.s32 %s153, 1
    %p157 = scmp.eq.s32.totalorder %s14, 7
    %p158 = scmp.ne.s32.totalorder %s153, %s155
    %p159 = scmp.eq.s32.totalorder %s14, 0
    %p160 = por %p158, %p159
    %p161 = scmp.ne.s32.totalorder %s153, %s155
    %p162 = scmp.eq.s32.totalorder %s19, 7
    %p163 = por %p161, %p162
    %p164 = scmp.ne.s32.totalorder %s155, %s156
    %p165 = scmp.eq.s32.totalorder %s19, 0
    %p166 = por %p164, %p165
    %p167 = scmp.ne.s32.totalorder %s155, %s156
    %p168 = scmp.eq.s32.totalorder %s20, 7
    %p169 = por %p167, %p168
    %p171 = scmp.ne.s32.totalorder %s156, %s170
    %p172 = scmp.eq.s32.totalorder %s20, 0
    %p173 = por %p171, %p172
    %s175 = sadd.s32 %s174, 1
    %p178 = scmp.eq.s32.totalorder %s14, 7
    %p179 = scmp.ne.s32.totalorder %s174, %s176
    %p180 = scmp.eq.s32.totalorder %s14, 0
    %p181 = por %p179, %p180
    %p182 = scmp.ne.s32.totalorder %s174, %s176
    %p183 = scmp.eq.s32.totalorder %s19, 7
    %p184 = por %p182, %p183
    %p185 = scmp.ne.s32.totalorder %s176, %s177
    %p186 = scmp.eq.s32.totalorder %s19, 0
    %p187 = por %p185, %p186
    %p188 = scmp.ne.s32.totalorder %s176, %s177
    %p189 = scmp.eq.s32.totalorder %s20, 7
    %p190 = por %p188, %p189
    %p192 = scmp.ne.s32.totalorder %s177, %s191
    %p193 = scmp.eq.s32.totalorder %s20, 0
    %p194 = por %p192, %p193
    %s195 = ssub.s32 %s14, %s21
    %p196 = scmp.eq.s32.totalorder %s195, 0
    %s198 = sadd.s32 %s197, 1
    %s199 = scalar_select %p196, %s197, %s198
    %p202 = pneg %p196
    %p203 = scmp.eq.s32.totalorder %s14, 7
    %p204 = por %p202, %p203
    %p205 = scmp.ne.s32.totalorder %s197, %s200
    %p206 = scmp.eq.s32.totalorder %s14, 0
    %p207 = por %p205, %p206
    %p208 = scmp.ne.s32.totalorder %s197, %s200
    %p209 = scmp.eq.s32.totalorder %s19, 7
    %p210 = por %p208, %p209
    %p211 = scmp.ne.s32.totalorder %s200, %s201
    %p212 = scmp.eq.s32.totalorder %s19, 0
    %p213 = por %p211, %p212
    %p214 = scmp.ne.s32.totalorder %s200, %s201
    %p215 = scmp.eq.s32.totalorder %s20, 7
    %p216 = por %p214, %p215
    %p218 = scmp.ne.s32.totalorder %s201, %s217
    %p219 = scmp.eq.s32.totalorder %s20, 0
    %p220 = por %p218, %p219
    %p221 = scmp.le.s32.totalorder 1, %s14
    %p222 = scmp.lt.s32.totalorder %s14, 9
    %p223 = pnand %p221, %p222
    %p224 = pneg %p223
    // Predicated region
    $region9: #{connnet_forward_pallas.1} parent=5 // pred_check
      _
    $region10: #{connnet_forward_pallas.1} parent=5 // pred_check_branch
      %226 = sbr.rel (%p223) target = $region12
    $region11: #{connnet_forward_pallas.1} parent=5 // pred_region
      %s227 = ssub.s32 %s14, 1
      // Predicated region
      $region13: #{connnet_forward_pallas.1} parent=11 // pred_check
        %p228 = pneg %p61
      $region14: #{connnet_forward_pallas.1} parent=11 // pred_check_branch
        %230 = sbr.rel (%p228) target = $region16
      $region15: #{connnet_forward_pallas.1} parent=11 // pred_region
        _
      $region16: #{connnet_forward_pallas.1} parent=11 // pred_fallthru
        _
      // Predicated region
      $region17: #{connnet_forward_pallas.1} parent=11 // pred_check
        %p231 = pneg %p82
      $region18: #{connnet_forward_pallas.1} parent=11 // pred_check_branch
        %233 = sbr.rel (%p231) target = $region20
      $region19: #{connnet_forward_pallas.1} parent=11 // pred_region
        _
      $region20: #{connnet_forward_pallas.1} parent=11 // pred_fallthru
        _
      // Predicated region
      $region21: #{connnet_forward_pallas.1} parent=11 // pred_check
        %p234 = pneg %p103
      $region22: #{connnet_forward_pallas.1} parent=11 // pred_check_branch
        %236 = sbr.rel (%p234) target = $region24
      $region23: #{connnet_forward_pallas.1} parent=11 // pred_region
        _
      $region24: #{connnet_forward_pallas.1} parent=11 // pred_fallthru
        _
      // Predicated region
      $region25: #{connnet_forward_pallas.1} parent=11 // pred_check
        %p237 = pneg %p124
      $region26: #{connnet_forward_pallas.1} parent=11 // pred_check_branch
        %239 = sbr.rel (%p237) target = $region28
      $region27: #{connnet_forward_pallas.1} parent=11 // pred_region
        _
      $region28: #{connnet_forward_pallas.1} parent=11 // pred_fallthru
        _
      // Predicated region
      $region29: #{connnet_forward_pallas.1} parent=11 // pred_check
        %p240 = pneg %p145
      $region30: #{connnet_forward_pallas.1} parent=11 // pred_check_branch
        %242 = sbr.rel (%p240) target = $region32
      $region31: #{connnet_forward_pallas.1} parent=11 // pred_region
        _
      $region32: #{connnet_forward_pallas.1} parent=11 // pred_fallthru
        _
      // Predicated region
      $region33: #{connnet_forward_pallas.1} parent=11 // pred_check
        %p243 = pneg %p166
      $region34: #{connnet_forward_pallas.1} parent=11 // pred_check_branch
        %245 = sbr.rel (%p243) target = $region36
      $region35: #{connnet_forward_pallas.1} parent=11 // pred_region
        _
      $region36: #{connnet_forward_pallas.1} parent=11 // pred_fallthru
        _
      // Predicated region
      $region37: #{connnet_forward_pallas.1} parent=11 // pred_check
        %p246 = pneg %p187
      $region38: #{connnet_forward_pallas.1} parent=11 // pred_check_branch
        %248 = sbr.rel (%p246) target = $region40
      $region39: #{connnet_forward_pallas.1} parent=11 // pred_region
        _
      $region40: #{connnet_forward_pallas.1} parent=11 // pred_fallthru
        _
    $region12: #{connnet_forward_pallas.1} parent=5 // pred_fallthru
      _
    %p249 = scmp.lt.s32.totalorder %s14, 8
    // Predicated region
    $region41: #{connnet_forward_pallas.1} parent=5 // pred_check
      %p250 = pneg %p249
    $region42: #{connnet_forward_pallas.1} parent=5 // pred_check_branch
      %252 = sbr.rel (%p250) target = $region44
    $region43: #{connnet_forward_pallas.1} parent=5 // pred_region
      // Predicated region
      $region45: #{connnet_forward_pallas.1} parent=43 // pred_check
        %p253 = pneg %p34
      $region46: #{connnet_forward_pallas.1} parent=43 // pred_check_branch
        %255 = sbr.rel (%p253) target = $region48
      $region47: #{connnet_forward_pallas.1} parent=43 // pred_region
        %p256 = scmp.lt.s32.totalorder %s14, 7
        %s257 = scalar_select %p256, %s14, 7
        %s258 = smul.addr %s257, 3
        %s259 = smul.addr %s258, 8
        %s260 = scalar_lea.vmem %s0, %s259
      $region48: #{connnet_forward_pallas.1} parent=43 // pred_fallthru
        _
    $region44: #{connnet_forward_pallas.1} parent=5 // pred_fallthru
      _
    %p261 = scmp.le.s32.totalorder 1, %s14
    %p262 = scmp.lt.s32.totalorder %s14, 9
    %p263 = pnand %p261, %p262
    %p264 = pneg %p263
    // Predicated region
    $region49: #{connnet_forward_pallas.1} parent=5 // pred_check
      _
    $region50: #{connnet_forward_pallas.1} parent=5 // pred_check_branch
      %266 = sbr.rel (%p263) target = $region52
    $region51: #{connnet_forward_pallas.1} parent=5 // pred_region
      %s267 = ssub.s32 %s14, 1
      %p268 = scmp.lt.s32.totalorder %s19, 7
      %s269 = scalar_select %p268, %s19, 7
      %s270 = smul.addr %s269, 3
      %s271 = smul.addr %s270, 8
      %s272 = scalar_lea.vmem %s0, %s271
      %p273 = pneg %p40
      %p274 = pneg %p37
      %p275 = pneg %p61
      %p276 = pneg %p58
      %p277 = pneg %p82
      %p278 = pneg %p79
      %p279 = pneg %p103
      %p280 = pneg %p100
      %p281 = pneg %p124
      %p282 = pneg %p121
      %p283 = pneg %p145
      %p284 = pneg %p142
      %p285 = pneg %p166
      %p286 = pneg %p163
      %p287 = pneg %p187
      %p288 = pneg %p184
      %p289 = pneg %p213
      %p290 = pneg %p210
      %p291 = scmp.lt.s32.totalorder %s19, 7
      %s292 = scalar_select %p291, %s19, 7
      %s293 = scalar_lea.vmem %s8, %s292
      %p294 = scmp.lt.s32.totalorder %s19, 7
      %s295 = scalar_select %p294, %s19, 7
      %s296 = smul.addr %s295, 3
      %s297 = smul.addr %s296, 8
      %s298 = scalar_lea.vmem %s0, %s297
      %p299 = scmp.lt.s32.totalorder %s19, 7
      %s300 = scalar_select %p299, %s19, 7
      %s301 = scalar_lea.vmem %s8, %s300
      %v302 = vld [vmem:[%s2] sm:$0xff]
      %v303 = vld [vmem:[%s2 + $0x8] sm:$0xff]
      %v304 = vld [vmem:[%s2 + $0x10] sm:$0xff]
      %v305 = vld [vmem:[%s2 + $0x18] sm:$0xff]
      %v306 = vld [vmem:[%s2 + $0x20] sm:$0xff]
      %v307 = vld [vmem:[%s2 + $0x28] sm:$0xff]
      %v308 = vld [vmem:[%s2 + $0x30] sm:$0xff]
      %v309 = vld [vmem:[%s2 + $0x38] sm:$0xff]
      %v310 = vld [vmem:[%s2 + $0x40] sm:$0xff]
      %v311 = vld [vmem:[%s2 + $0x48] sm:$0xff]
      %v312 = vld [vmem:[%s2 + $0x50] sm:$0xff]
      %v313 = vld [vmem:[%s2 + $0x58] sm:$0xff]
      %v314 = vld [vmem:[%s2 + $0x60] sm:$0xff]
      %v315 = vld [vmem:[%s2 + $0x68] sm:$0xff]
      %v316 = vld [vmem:[%s2 + $0x70] sm:$0xff]
      %v317 = vld [vmem:[%s2 + $0x78] sm:$0xff]
      %v318 = vld [vmem:[%s1] sm:$0xff]
      %v319 = vld [vmem:[%s1 + $0x8] sm:$0xff]
      %v320 = vld [vmem:[%s1 + $0x10] sm:$0xff]
      %v321 = vld [vmem:[%s1 + $0x18] sm:$0xff]
      %v322 = vld [vmem:[%s1 + $0x20] sm:$0xff]
      %v323 = vld [vmem:[%s1 + $0x28] sm:$0xff]
      %v324 = vld [vmem:[%s1 + $0x30] sm:$0xff]
      %v325 = vld [vmem:[%s1 + $0x38] sm:$0xff]
      %v326 = vld [vmem:[%s1 + $0x40] sm:$0xff]
      %v327 = vld [vmem:[%s1 + $0x48] sm:$0xff]
      %v328 = vld [vmem:[%s1 + $0x50] sm:$0xff]
      %v329 = vld [vmem:[%s1 + $0x58] sm:$0xff]
      %v330 = vld [vmem:[%s1 + $0x60] sm:$0xff]
      %v331 = vld [vmem:[%s1 + $0x68] sm:$0xff]
      %v332 = vld [vmem:[%s1 + $0x70] sm:$0xff]
      %v333 = vld [vmem:[%s1 + $0x78] sm:$0xff]
      %v334 = vld [vmem:[%s298] sm:$0xff]
      %v335 = vld [vmem:[%s298 + $0x8] sm:$0xff]
      %v336 = vld [vmem:[%s298 + $0x10] sm:$0x3]
      %338 = vset.pattern.permute.xlu0 0
      %339 = vperm.xlu0 %338, %v302
      %v340 = vpop.permute.xlu0 %339
      %343 = vset.pattern.permute.xlu0 0
      %344 = vperm.xlu0 %343, %v303
      %v345 = vpop.permute.xlu0 %344
      %348 = vset.pattern.permute.xlu0 0
      %349 = vperm.xlu0 %348, %v304
      %v350 = vpop.permute.xlu0 %349
      %353 = vset.pattern.permute.xlu0 0
      %354 = vperm.xlu0 %353, %v305
      %v355 = vpop.permute.xlu0 %354
      %358 = vset.pattern.permute.xlu0 0
      %359 = vperm.xlu0 %358, %v306
      %v360 = vpop.permute.xlu0 %359
      %363 = vset.pattern.permute.xlu0 0
      %364 = vperm.xlu0 %363, %v307
      %v365 = vpop.permute.xlu0 %364
      %368 = vset.pattern.permute.xlu0 0
      %369 = vperm.xlu0 %368, %v308
      %v370 = vpop.permute.xlu0 %369
      %373 = vset.pattern.permute.xlu0 0
      %374 = vperm.xlu0 %373, %v309
      %v375 = vpop.permute.xlu0 %374
      %378 = vset.pattern.permute.xlu0 0
      %379 = vperm.xlu0 %378, %v310
      %v380 = vpop.permute.xlu0 %379
      %383 = vset.pattern.permute.xlu0 0
      %384 = vperm.xlu0 %383, %v311
      %v385 = vpop.permute.xlu0 %384
      %388 = vset.pattern.permute.xlu0 0
      %389 = vperm.xlu0 %388, %v312
      %v390 = vpop.permute.xlu0 %389
      %393 = vset.pattern.permute.xlu0 0
      %394 = vperm.xlu0 %393, %v313
      %v395 = vpop.permute.xlu0 %394
      %398 = vset.pattern.permute.xlu0 0
      %399 = vperm.xlu0 %398, %v314
      %v400 = vpop.permute.xlu0 %399
      %403 = vset.pattern.permute.xlu0 0
      %404 = vperm.xlu0 %403, %v315
      %v405 = vpop.permute.xlu0 %404
      %408 = vset.pattern.permute.xlu0 0
      %409 = vperm.xlu0 %408, %v316
      %v410 = vpop.permute.xlu0 %409
      %413 = vset.pattern.permute.xlu0 0
      %414 = vperm.xlu0 %413, %v317
      %v415 = vpop.permute.xlu0 %414
      %vm417 = vcmask 146432
      %v419 = vsel %vm417, %v318, 0
      %v422 = vsel %vm417, %v319, 0
      %v425 = vsel %vm417, %v320, 0
      %v428 = vsel %vm417, %v321, 0
      %v431 = vsel %vm417, %v322, 0
      %v434 = vsel %vm417, %v323, 0
      %v437 = vsel %vm417, %v324, 0
      %v440 = vsel %vm417, %v325, 0
      %v443 = vsel %vm417, %v326, 0
      %v446 = vsel %vm417, %v327, 0
      %v449 = vsel %vm417, %v328, 0
      %v452 = vsel %vm417, %v329, 0
      %v455 = vsel %vm417, %v330, 0
      %v458 = vsel %vm417, %v331, 0
      %v461 = vsel %vm417, %v332, 0
      %v464 = vsel %vm417, %v333, 0
      %vm466 = vcmask 1041408
      %v468 = vsel %vm466, %v336, 0
      %470 = vmatprep.subr.mxu0 0.0
      %471 = vmatpush1.msra.mxu0 %v334
      %472 = vmatprep.subr.mxu0 0.0
      %473 = vmatpush1.msra.mxu0 %v335
      %474 = vmatprep.subr.mxu0 0.0
      %475 = vmatpush1.msra.mxu0 %v468
      %476 = vmatprep.subr.mxu0 0.0
      %477 = vmatpush1.msra.mxu0 0.0
      %478 = vmatprep.subr.mxu0 0.0
      %479 = vmatpush1.msra.mxu0 0.0
      %480 = vmatprep.subr.mxu0 0.0
      %481 = vmatpush1.msra.mxu0 0.0
      %482 = vmatprep.subr.mxu0 0.0
      %483 = vmatpush1.msra.mxu0 0.0
      %484 = vmatprep.subr.mxu0 0.0
      %485 = vmatpush1.msra.mxu0 0.0
      %486 = vmatprep.subr.mxu0 0.0
      %487 = vmatpush1.msra.mxu0 0.0
      %488 = vmatprep.subr.mxu0 0.0
      %489 = vmatpush1.msra.mxu0 0.0
      %490 = vmatprep.subr.mxu0 0.0
      %491 = vmatpush1.msra.mxu0 0.0
      %492 = vmatprep.subr.mxu0 0.0
      %493 = vmatpush1.msra.mxu0 0.0
      %494 = vmatprep.subr.mxu0 0.0
      %495 = vmatpush1.msra.mxu0 0.0
      %496 = vmatprep.subr.mxu0 0.0
      %497 = vmatpush1.msra.mxu0 0.0
      %498 = vmatprep.subr.mxu0 0.0
      %499 = vmatpush1.msra.mxu0 0.0
      %500 = vmatprep.subr.mxu0 0.0
      %501 = vmatpush1.msra.mxu0 0.0
      %502 = vmatprep.subr.mxu0 0.0
      %503 = vmatpush1.msra.mxu0 0.0
      %504 = vmatprep.subr.mxu0 0.0
      %505 = vmatpush1.msra.mxu0 0.0
      %506 = vmatprep.subr.mxu0 0.0
      %507 = vmatpush1.msra.mxu0 0.0
      %508 = vmatprep.subr.mxu0 0.0
      %509 = vmatpush1.msra.mxu0 0.0
      %510 = vmatprep.subr.mxu0 0.0
      %511 = vmatpush1.msra.mxu0 0.0
      %512 = vmatprep.subr.mxu0 0.0
      %513 = vmatpush1.msra.mxu0 0.0
      %514 = vmatprep.subr.mxu0 0.0
      %515 = vmatpush1.msra.mxu0 0.0
      %516 = vmatprep.subr.mxu0 0.0
      %517 = vmatpush1.msra.mxu0 0.0
      %518 = vmatprep.subr.mxu0 0.0
      %519 = vmatpush1.msra.mxu0 0.0
      %520 = vmatprep.subr.mxu0 0.0
      %521 = vmatpush1.msra.mxu0 0.0
      %522 = vmatprep.subr.mxu0 0.0
      %523 = vmatpush1.msra.mxu0 0.0
      %524 = vmatprep.subr.mxu0 0.0
      %525 = vmatpush1.msra.mxu0 0.0
      %526 = vmatprep.subr.mxu0 0.0
      %527 = vmatpush1.msra.mxu0 0.0
      %528 = vmatprep.subr.mxu0 0.0
      %529 = vmatpush1.msra.mxu0 0.0
      %530 = vmatprep.subr.mxu0 0.0
      %531 = vmatpush1.msra.mxu0 0.0
      %532 = vmatprep.subr.mxu0 0.0
      %533 = vmatpush1.msra.mxu0 0.0
      %534 = vmatprep.mubr.f32.mxu0 0.0
      %535 = vmatmul.mubr.f32.gmra.mrb[0].mxu0 %v419
      %v536 = vpop.f32.mrb[0].mxu0
      %v537 = vadd.f32 %v340, %v536
      %v538 = vpop.f32.mrb[0].mxu0
      %539 = vmatprep.mubr.f32.mxu0 0.0
      %540 = vmatmul.mubr.f32.gmra.mrb[0].mxu0 %v422
      %v541 = vpop.f32.mrb[0].mxu0
      %v542 = vadd.f32 %v345, %v541
      %v543 = vpop.f32.mrb[0].mxu0
      %544 = vmatprep.mubr.f32.mxu0 0.0
      %545 = vmatmul.mubr.f32.gmra.mrb[0].mxu0 %v425
      %v546 = vpop.f32.mrb[0].mxu0
      %v547 = vadd.f32 %v350, %v546
      %v548 = vpop.f32.mrb[0].mxu0
      %549 = vmatprep.mubr.f32.mxu0 0.0
      %550 = vmatmul.mubr.f32.gmra.mrb[0].mxu0 %v428
      %v551 = vpop.f32.mrb[0].mxu0
      %v552 = vadd.f32 %v355, %v551
      %v553 = vpop.f32.mrb[0].mxu0
      %554 = vmatprep.mubr.f32.mxu0 0.0
      %555 = vmatmul.mubr.f32.gmra.mrb[0].mxu0 %v431
      %v556 = vpop.f32.mrb[0].mxu0
      %v557 = vadd.f32 %v360, %v556
      %v558 = vpop.f32.mrb[0].mxu0
      %559 = vmatprep.mubr.f32.mxu0 0.0
      %560 = vmatmul.mubr.f32.gmra.mrb[0].mxu0 %v434
      %v561 = vpop.f32.mrb[0].mxu0
      %v562 = vadd.f32 %v365, %v561
      %v563 = vpop.f32.mrb[0].mxu0
      %564 = vmatprep.mubr.f32.mxu0 0.0
      %565 = vmatmul.mubr.f32.gmra.mrb[0].mxu0 %v437
      %v566 = vpop.f32.mrb[0].mxu0
      %v567 = vadd.f32 %v370, %v566
      %v568 = vpop.f32.mrb[0].mxu0
      %569 = vmatprep.mubr.f32.mxu0 0.0
      %570 = vmatmul.mubr.f32.gmra.mrb[0].mxu0 %v440
      %v571 = vpop.f32.mrb[0].mxu0
      %v572 = vadd.f32 %v375, %v571
      %v573 = vpop.f32.mrb[0].mxu0
      %574 = vmatprep.mubr.f32.mxu0 0.0
      %575 = vmatmul.mubr.f32.gmra.mrb[0].mxu0 %v443
      %v576 = vpop.f32.mrb[0].mxu0
      %v577 = vadd.f32 %v380, %v576
      %v578 = vpop.f32.mrb[0].mxu0
      %579 = vmatprep.mubr.f32.mxu0 0.0
      %580 = vmatmul.mubr.f32.gmra.mrb[0].mxu0 %v446
      %v581 = vpop.f32.mrb[0].mxu0
      %v582 = vadd.f32 %v385, %v581
      %v583 = vpop.f32.mrb[0].mxu0
      %584 = vmatprep.mubr.f32.mxu0 0.0
      %585 = vmatmul.mubr.f32.gmra.mrb[0].mxu0 %v449
      %v586 = vpop.f32.mrb[0].mxu0
      %v587 = vadd.f32 %v390, %v586
      %v588 = vpop.f32.mrb[0].mxu0
      %589 = vmatprep.mubr.f32.mxu0 0.0
      %590 = vmatmul.mubr.f32.gmra.mrb[0].mxu0 %v452
      %v591 = vpop.f32.mrb[0].mxu0
      %v592 = vadd.f32 %v395, %v591
      %v593 = vpop.f32.mrb[0].mxu0
      %594 = vmatprep.mubr.f32.mxu0 0.0
      %595 = vmatmul.mubr.f32.gmra.mrb[0].mxu0 %v455
      %v596 = vpop.f32.mrb[0].mxu0
      %v597 = vadd.f32 %v400, %v596
      %v598 = vpop.f32.mrb[0].mxu0
      %599 = vmatprep.mubr.f32.mxu0 0.0
      %600 = vmatmul.mubr.f32.gmra.mrb[0].mxu0 %v458
      %v601 = vpop.f32.mrb[0].mxu0
      %v602 = vadd.f32 %v405, %v601
      %v603 = vpop.f32.mrb[0].mxu0
      %604 = vmatprep.mubr.f32.mxu0 0.0
      %605 = vmatmul.mubr.f32.gmra.mrb[0].mxu0 %v461
      %v606 = vpop.f32.mrb[0].mxu0
      %v607 = vadd.f32 %v410, %v606
      %v608 = vpop.f32.mrb[0].mxu0
      %609 = vmatprep.mubr.f32.mxu0 0.0
      %610 = vmatmul.mubr.f32.gmra.mrb[0].mxu0 %v464
      %v611 = vpop.f32.mrb[0].mxu0
      %v612 = vadd.f32 %v415, %v611
      %v613 = vpop.f32.mrb[0].mxu0
      %614 = vdwg.mxu0
      %vm615 = vcmp.gt.f32.partialorder %v537, 0.0
      %vm616 = vcmp.gt.f32.partialorder %v542, 0.0
      %vm617 = vcmp.gt.f32.partialorder %v547, 0.0
      %vm618 = vcmp.gt.f32.partialorder %v552, 0.0
      %vm619 = vcmp.gt.f32.partialorder %v557, 0.0
      %vm620 = vcmp.gt.f32.partialorder %v562, 0.0
      %vm621 = vcmp.gt.f32.partialorder %v567, 0.0
      %vm622 = vcmp.gt.f32.partialorder %v572, 0.0
      %vm623 = vcmp.gt.f32.partialorder %v577, 0.0
      %vm624 = vcmp.gt.f32.partialorder %v582, 0.0
      %vm625 = vcmp.gt.f32.partialorder %v587, 0.0
      %vm626 = vcmp.gt.f32.partialorder %v592, 0.0
      %vm627 = vcmp.gt.f32.partialorder %v597, 0.0
      %vm628 = vcmp.gt.f32.partialorder %v602, 0.0
      %vm629 = vcmp.gt.f32.partialorder %v607, 0.0
      %vm630 = vcmp.gt.f32.partialorder %v612, 0.0
      %v631 = vmul.f32 %v537, 0.01
      %v632 = vmul.f32 %v542, 0.01
      %v633 = vmul.f32 %v547, 0.01
      %v634 = vmul.f32 %v552, 0.01
      %v635 = vmul.f32 %v557, 0.01
      %v636 = vmul.f32 %v562, 0.01
      %v637 = vmul.f32 %v567, 0.01
      %v638 = vmul.f32 %v572, 0.01
      %v639 = vmul.f32 %v577, 0.01
      %v640 = vmul.f32 %v582, 0.01
      %v641 = vmul.f32 %v587, 0.01
      %v642 = vmul.f32 %v592, 0.01
      %v643 = vmul.f32 %v597, 0.01
      %v644 = vmul.f32 %v602, 0.01
      %v645 = vmul.f32 %v607, 0.01
      %v646 = vmul.f32 %v612, 0.01
      %v647 = vsel %vm615, %v537, %v631
      %v648 = vsel %vm616, %v542, %v632
      %v649 = vsel %vm617, %v547, %v633
      %v650 = vsel %vm618, %v552, %v634
      %v651 = vsel %vm619, %v557, %v635
      %v652 = vsel %vm620, %v562, %v636
      %v653 = vsel %vm621, %v567, %v637
      %v654 = vsel %vm622, %v572, %v638
      %v655 = vsel %vm623, %v577, %v639
      %v656 = vsel %vm624, %v582, %v640
      %v657 = vsel %vm625, %v587, %v641
      %v658 = vsel %vm626, %v592, %v642
      %v659 = vsel %vm627, %v597, %v643
      %v660 = vsel %vm628, %v602, %v644
      %v661 = vsel %vm629, %v607, %v645
      %v662 = vsel %vm630, %v612, %v646
      %vm663 = vcmask 343040
      %v664 = vsel %vm663, %v647, 0.0
      %665 = vadd.xlane.f32.xlu0 %v664
      %v666 = vpop.xlane.xlu0 %665
      %v667 = vsel %vm663, %v648, 0.0
      %668 = vadd.xlane.f32.xlu0 %v667
      %v669 = vpop.xlane.xlu0 %668
      %v670 = vsel %vm663, %v649, 0.0
      %671 = vadd.xlane.f32.xlu0 %v670
      %v672 = vpop.xlane.xlu0 %671
      %v673 = vsel %vm663, %v650, 0.0
      %674 = vadd.xlane.f32.xlu0 %v673
      %v675 = vpop.xlane.xlu0 %674
      %v676 = vsel %vm663, %v651, 0.0
      %677 = vadd.xlane.f32.xlu0 %v676
      %v678 = vpop.xlane.xlu0 %677
      %v679 = vsel %vm663, %v652, 0.0
      %680 = vadd.xlane.f32.xlu0 %v679
      %v681 = vpop.xlane.xlu0 %680
      %v682 = vsel %vm663, %v653, 0.0
      %683 = vadd.xlane.f32.xlu0 %v682
      %v684 = vpop.xlane.xlu0 %683
      %v685 = vsel %vm663, %v654, 0.0
      %686 = vadd.xlane.f32.xlu0 %v685
      %v687 = vpop.xlane.xlu0 %686
      %v688 = vsel %vm663, %v655, 0.0
      %689 = vadd.xlane.f32.xlu0 %v688
      %v690 = vpop.xlane.xlu0 %689
      %v691 = vsel %vm663, %v656, 0.0
      %692 = vadd.xlane.f32.xlu0 %v691
      %v693 = vpop.xlane.xlu0 %692
      %v694 = vsel %vm663, %v657, 0.0
      %695 = vadd.xlane.f32.xlu0 %v694
      %v696 = vpop.xlane.xlu0 %695
      %v697 = vsel %vm663, %v658, 0.0
      %698 = vadd.xlane.f32.xlu0 %v697
      %v699 = vpop.xlane.xlu0 %698
      %v700 = vsel %vm663, %v659, 0.0
      %701 = vadd.xlane.f32.xlu0 %v700
      %v702 = vpop.xlane.xlu0 %701
      %v703 = vsel %vm663, %v660, 0.0
      %704 = vadd.xlane.f32.xlu0 %v703
      %v705 = vpop.xlane.xlu0 %704
      %v706 = vsel %vm663, %v661, 0.0
      %707 = vadd.xlane.f32.xlu0 %v706
      %v708 = vpop.xlane.xlu0 %707
      %v709 = vsel %vm663, %v662, 0.0
      %710 = vadd.xlane.f32.xlu0 %v709
      %v711 = vpop.xlane.xlu0 %710
      %v712 = vrcp.pop 42.0
      %v713 = vmul.f32 %v666, %v712
      %v714 = vmul.f32 %v669, %v712
      %v715 = vmul.f32 %v672, %v712
      %v716 = vmul.f32 %v675, %v712
      %v717 = vmul.f32 %v678, %v712
      %v718 = vmul.f32 %v681, %v712
      %v719 = vmul.f32 %v684, %v712
      %v720 = vmul.f32 %v687, %v712
      %v721 = vmul.f32 %v690, %v712
      %v722 = vmul.f32 %v693, %v712
      %v723 = vmul.f32 %v696, %v712
      %v724 = vmul.f32 %v699, %v712
      %v725 = vmul.f32 %v702, %v712
      %v726 = vmul.f32 %v705, %v712
      %v727 = vmul.f32 %v708, %v712
      %v728 = vmul.f32 %v711, %v712
      %v729 = vmul.f32 %v647, %v647
      %v730 = vmul.f32 %v648, %v648
      %v731 = vmul.f32 %v649, %v649
      %v732 = vmul.f32 %v650, %v650
      %v733 = vmul.f32 %v651, %v651
      %v734 = vmul.f32 %v652, %v652
      %v735 = vmul.f32 %v653, %v653
      %v736 = vmul.f32 %v654, %v654
      %v737 = vmul.f32 %v655, %v655
      %v738 = vmul.f32 %v656, %v656
      %v739 = vmul.f32 %v657, %v657
      %v740 = vmul.f32 %v658, %v658
      %v741 = vmul.f32 %v659, %v659
      %v742 = vmul.f32 %v660, %v660
      %v743 = vmul.f32 %v661, %v661
      %v744 = vmul.f32 %v662, %v662
      %v745 = vsel %vm663, %v729, 0.0
      %746 = vadd.xlane.f32.xlu0 %v745
      %v747 = vpop.xlane.xlu0 %746
      %v748 = vsel %vm663, %v730, 0.0
      %749 = vadd.xlane.f32.xlu0 %v748
      %v750 = vpop.xlane.xlu0 %749
      %v751 = vsel %vm663, %v731, 0.0
      %752 = vadd.xlane.f32.xlu0 %v751
      %v753 = vpop.xlane.xlu0 %752
      %v754 = vsel %vm663, %v732, 0.0
      %755 = vadd.xlane.f32.xlu0 %v754
      %v756 = vpop.xlane.xlu0 %755
      %v757 = vsel %vm663, %v733, 0.0
      %758 = vadd.xlane.f32.xlu0 %v757
      %v759 = vpop.xlane.xlu0 %758
      %v760 = vsel %vm663, %v734, 0.0
      %761 = vadd.xlane.f32.xlu0 %v760
      %v762 = vpop.xlane.xlu0 %761
      %v763 = vsel %vm663, %v735, 0.0
      %764 = vadd.xlane.f32.xlu0 %v763
      %v765 = vpop.xlane.xlu0 %764
      %v766 = vsel %vm663, %v736, 0.0
      %767 = vadd.xlane.f32.xlu0 %v766
      %v768 = vpop.xlane.xlu0 %767
      %v769 = vsel %vm663, %v737, 0.0
      %770 = vadd.xlane.f32.xlu0 %v769
      %v771 = vpop.xlane.xlu0 %770
      %v772 = vsel %vm663, %v738, 0.0
      %773 = vadd.xlane.f32.xlu0 %v772
      %v774 = vpop.xlane.xlu0 %773
      %v775 = vsel %vm663, %v739, 0.0
      %776 = vadd.xlane.f32.xlu0 %v775
      %v777 = vpop.xlane.xlu0 %776
      %v778 = vsel %vm663, %v740, 0.0
      %779 = vadd.xlane.f32.xlu0 %v778
      %v780 = vpop.xlane.xlu0 %779
      %v781 = vsel %vm663, %v741, 0.0
      %782 = vadd.xlane.f32.xlu0 %v781
      %v783 = vpop.xlane.xlu0 %782
      %v784 = vsel %vm663, %v742, 0.0
      %785 = vadd.xlane.f32.xlu0 %v784
      %v786 = vpop.xlane.xlu0 %785
      %v787 = vsel %vm663, %v743, 0.0
      %788 = vadd.xlane.f32.xlu0 %v787
      %v789 = vpop.xlane.xlu0 %788
      %v790 = vsel %vm663, %v744, 0.0
      %791 = vadd.xlane.f32.xlu0 %v790
      %v792 = vpop.xlane.xlu0 %791
      %v793 = vmul.f32 %v747, %v712
      %v794 = vmul.f32 %v750, %v712
      %v795 = vmul.f32 %v753, %v712
      %v796 = vmul.f32 %v756, %v712
      %v797 = vmul.f32 %v759, %v712
      %v798 = vmul.f32 %v762, %v712
      %v799 = vmul.f32 %v765, %v712
      %v800 = vmul.f32 %v768, %v712
      %v801 = vmul.f32 %v771, %v712
      %v802 = vmul.f32 %v774, %v712
      %v803 = vmul.f32 %v777, %v712
      %v804 = vmul.f32 %v780, %v712
      %v805 = vmul.f32 %v783, %v712
      %v806 = vmul.f32 %v786, %v712
      %v807 = vmul.f32 %v789, %v712
      %v808 = vmul.f32 %v792, %v712
      %v809 = vmul.f32 %v713, %v713
      %v810 = vmul.f32 %v714, %v714
      %v811 = vmul.f32 %v715, %v715
      %v812 = vmul.f32 %v716, %v716
      %v813 = vmul.f32 %v717, %v717
      %v814 = vmul.f32 %v718, %v718
      %v815 = vmul.f32 %v719, %v719
      %v816 = vmul.f32 %v720, %v720
      %v817 = vmul.f32 %v721, %v721
      %v818 = vmul.f32 %v722, %v722
      %v819 = vmul.f32 %v723, %v723
      %v820 = vmul.f32 %v724, %v724
      %v821 = vmul.f32 %v725, %v725
      %v822 = vmul.f32 %v726, %v726
      %v823 = vmul.f32 %v727, %v727
      %v824 = vmul.f32 %v728, %v728
      %v825 = vsub.f32 %v793, %v809
      %v826 = vsub.f32 %v794, %v810
      %v827 = vsub.f32 %v795, %v811
      %v828 = vsub.f32 %v796, %v812
      %v829 = vsub.f32 %v797, %v813
      %v830 = vsub.f32 %v798, %v814
      %v831 = vsub.f32 %v799, %v815
      %v832 = vsub.f32 %v800, %v816
      %v833 = vsub.f32 %v801, %v817
      %v834 = vsub.f32 %v802, %v818
      %v835 = vsub.f32 %v803, %v819
      %v836 = vsub.f32 %v804, %v820
      %v837 = vsub.f32 %v805, %v821
      %v838 = vsub.f32 %v806, %v822
      %v839 = vsub.f32 %v807, %v823
      %v840 = vsub.f32 %v808, %v824
      %v841 = vadd.f32 %v825, 1e-05
      %v842 = vadd.f32 %v826, 1e-05
      %v843 = vadd.f32 %v827, 1e-05
      %v844 = vadd.f32 %v828, 1e-05
      %v845 = vadd.f32 %v829, 1e-05
      %v846 = vadd.f32 %v830, 1e-05
      %v847 = vadd.f32 %v831, 1e-05
      %v848 = vadd.f32 %v832, 1e-05
      %v849 = vadd.f32 %v833, 1e-05
      %v850 = vadd.f32 %v834, 1e-05
      %v851 = vadd.f32 %v835, 1e-05
      %v852 = vadd.f32 %v836, 1e-05
      %v853 = vadd.f32 %v837, 1e-05
      %v854 = vadd.f32 %v838, 1e-05
      %v855 = vadd.f32 %v839, 1e-05
      %v856 = vadd.f32 %v840, 1e-05
      %v857 = vrsqrt.pop %v841
      %v858 = vrsqrt.pop %v842
      %v859 = vrsqrt.pop %v843
      %v860 = vrsqrt.pop %v844
      %v861 = vrsqrt.pop %v845
      %v862 = vrsqrt.pop %v846
      %v863 = vrsqrt.pop %v847
      %v864 = vrsqrt.pop %v848
      %v865 = vrsqrt.pop %v849
      %v866 = vrsqrt.pop %v850
      %v867 = vrsqrt.pop %v851
      %v868 = vrsqrt.pop %v852
      %v869 = vrsqrt.pop %v853
      %v870 = vrsqrt.pop %v854
      %v871 = vrsqrt.pop %v855
      %v872 = vrsqrt.pop %v856
      %v873 = vmul.f32 %v857, %v302
      %v874 = vmul.f32 %v858, %v303
      %v875 = vmul.f32 %v859, %v304
      %v876 = vmul.f32 %v860, %v305
      %v877 = vmul.f32 %v861, %v306
      %v878 = vmul.f32 %v862, %v307
      %v879 = vmul.f32 %v863, %v308
      %v880 = vmul.f32 %v864, %v309
      %v881 = vmul.f32 %v865, %v310
      %v882 = vmul.f32 %v866, %v311
      %v883 = vmul.f32 %v867, %v312
      %v884 = vmul.f32 %v868, %v313
      %v885 = vmul.f32 %v869, %v314
      %v886 = vmul.f32 %v870, %v315
      %v887 = vmul.f32 %v871, %v316
      %v888 = vmul.f32 %v872, %v317
      %890 = vset.pattern.permute.xlu0 1
      %891 = vperm.xlu0 %890, %v873
      %v892 = vpop.permute.xlu0 %891
      %895 = vset.pattern.permute.xlu0 1
      %896 = vperm.xlu0 %895, %v874
      %v897 = vpop.permute.xlu0 %896
      %900 = vset.pattern.permute.xlu0 1
      %901 = vperm.xlu0 %900, %v875
      %v902 = vpop.permute.xlu0 %901
      %905 = vset.pattern.permute.xlu0 1
      %906 = vperm.xlu0 %905, %v876
      %v907 = vpop.permute.xlu0 %906
      %910 = vset.pattern.permute.xlu0 1
      %911 = vperm.xlu0 %910, %v877
      %v912 = vpop.permute.xlu0 %911
      %915 = vset.pattern.permute.xlu0 1
      %916 = vperm.xlu0 %915, %v878
      %v917 = vpop.permute.xlu0 %916
      %920 = vset.pattern.permute.xlu0 1
      %921 = vperm.xlu0 %920, %v879
      %v922 = vpop.permute.xlu0 %921
      %925 = vset.pattern.permute.xlu0 1
      %926 = vperm.xlu0 %925, %v880
      %v927 = vpop.permute.xlu0 %926
      %930 = vset.pattern.permute.xlu0 1
      %931 = vperm.xlu0 %930, %v881
      %v932 = vpop.permute.xlu0 %931
      %935 = vset.pattern.permute.xlu0 1
      %936 = vperm.xlu0 %935, %v882
      %v937 = vpop.permute.xlu0 %936
      %940 = vset.pattern.permute.xlu0 1
      %941 = vperm.xlu0 %940, %v883
      %v942 = vpop.permute.xlu0 %941
      %945 = vset.pattern.permute.xlu0 1
      %946 = vperm.xlu0 %945, %v884
      %v947 = vpop.permute.xlu0 %946
      %950 = vset.pattern.permute.xlu0 1
      %951 = vperm.xlu0 %950, %v885
      %v952 = vpop.permute.xlu0 %951
      %955 = vset.pattern.permute.xlu0 1
      %956 = vperm.xlu0 %955, %v886
      %v957 = vpop.permute.xlu0 %956
      %960 = vset.pattern.permute.xlu0 1
      %961 = vperm.xlu0 %960, %v887
      %v962 = vpop.permute.xlu0 %961
      %965 = vset.pattern.permute.xlu0 1
      %966 = vperm.xlu0 %965, %v888
      %v967 = vpop.permute.xlu0 %966
      %v969 = vmul.f32 %v647, %v892
      %v970 = vmul.f32 %v648, %v897
      %v971 = vmul.f32 %v649, %v902
      %v972 = vmul.f32 %v650, %v907
      %v973 = vmul.f32 %v651, %v912
      %v974 = vmul.f32 %v652, %v917
      %v975 = vmul.f32 %v653, %v922
      %v976 = vmul.f32 %v654, %v927
      %v977 = vmul.f32 %v655, %v932
      %v978 = vmul.f32 %v656, %v937
      %v979 = vmul.f32 %v657, %v942
      %v980 = vmul.f32 %v658, %v947
      %v981 = vmul.f32 %v659, %v952
      %v982 = vmul.f32 %v660, %v957
      %v983 = vmul.f32 %v661, %v962
      %v984 = vmul.f32 %v662, %v967
      %v985 = vmul.f32 %v713, %v873
      %v986 = vmul.f32 %v714, %v874
      %v987 = vmul.f32 %v715, %v875
      %v988 = vmul.f32 %v716, %v876
      %v989 = vmul.f32 %v717, %v877
      %v990 = vmul.f32 %v718, %v878
      %v991 = vmul.f32 %v719, %v879
      %v992 = vmul.f32 %v720, %v880
      %v993 = vmul.f32 %v721, %v881
      %v994 = vmul.f32 %v722, %v882
      %v995 = vmul.f32 %v723, %v883
      %v996 = vmul.f32 %v724, %v884
      %v997 = vmul.f32 %v725, %v885
      %v998 = vmul.f32 %v726, %v886
      %v999 = vmul.f32 %v727, %v887
      %v1000 = vmul.f32 %v728, %v888
      %1017 = vrot.lane.b32.xlu0 %v985, 1
      %v1018 = vpop.permute.xlu0 %1017
      %1019 = vrot.lane.b32.xlu0 %v986, 1
      %v1020 = vpop.permute.xlu0 %1019
      %1021 = vrot.lane.b32.xlu0 %v987, 1
      %v1022 = vpop.permute.xlu0 %1021
      %1023 = vrot.lane.b32.xlu0 %v988, 1
      %v1024 = vpop.permute.xlu0 %1023
      %1025 = vrot.lane.b32.xlu0 %v989, 1
      %v1026 = vpop.permute.xlu0 %1025
      %1027 = vrot.lane.b32.xlu0 %v990, 1
      %v1028 = vpop.permute.xlu0 %1027
      %1029 = vrot.lane.b32.xlu0 %v991, 1
      %v1030 = vpop.permute.xlu0 %1029
      %1031 = vrot.lane.b32.xlu0 %v992, 1
      %v1032 = vpop.permute.xlu0 %1031
      %1033 = vrot.lane.b32.xlu0 %v993, 1
      %v1034 = vpop.permute.xlu0 %1033
      %1035 = vrot.lane.b32.xlu0 %v994, 1
      %v1036 = vpop.permute.xlu0 %1035
      %1037 = vrot.lane.b32.xlu0 %v995, 1
      %v1038 = vpop.permute.xlu0 %1037
      %1039 = vrot.lane.b32.xlu0 %v996, 1
      %v1040 = vpop.permute.xlu0 %1039
      %1041 = vrot.lane.b32.xlu0 %v997, 1
      %v1042 = vpop.permute.xlu0 %1041
      %1043 = vrot.lane.b32.xlu0 %v998, 1
      %v1044 = vpop.permute.xlu0 %1043
      %1045 = vrot.lane.b32.xlu0 %v999, 1
      %v1046 = vpop.permute.xlu0 %1045
      %1047 = vrot.lane.b32.xlu0 %v1000, 1
      %v1048 = vpop.permute.xlu0 %1047
      %v1065 = vsub.f32 %v302, %v1018
      %v1066 = vsub.f32 %v303, %v1020
      %v1067 = vsub.f32 %v304, %v1022
      %v1068 = vsub.f32 %v305, %v1024
      %v1069 = vsub.f32 %v306, %v1026
      %v1070 = vsub.f32 %v307, %v1028
      %v1071 = vsub.f32 %v308, %v1030
      %v1072 = vsub.f32 %v309, %v1032
      %v1073 = vsub.f32 %v310, %v1034
      %v1074 = vsub.f32 %v311, %v1036
      %v1075 = vsub.f32 %v312, %v1038
      %v1076 = vsub.f32 %v313, %v1040
      %v1077 = vsub.f32 %v314, %v1042
      %v1078 = vsub.f32 %v315, %v1044
      %v1079 = vsub.f32 %v316, %v1046
      %v1080 = vsub.f32 %v317, %v1048
      %1082 = vset.pattern.permute.xlu0 2
      %1083 = vperm.xlu0 %1082, %v1065
      %v1084 = vpop.permute.xlu0 %1083
      %1087 = vset.pattern.permute.xlu0 2
      %1088 = vperm.xlu0 %1087, %v1066
      %v1089 = vpop.permute.xlu0 %1088
      %1092 = vset.pattern.permute.xlu0 2
      %1093 = vperm.xlu0 %1092, %v1067
      %v1094 = vpop.permute.xlu0 %1093
      %1097 = vset.pattern.permute.xlu0 2
      %1098 = vperm.xlu0 %1097, %v1068
      %v1099 = vpop.permute.xlu0 %1098
      %1102 = vset.pattern.permute.xlu0 2
      %1103 = vperm.xlu0 %1102, %v1069
      %v1104 = vpop.permute.xlu0 %1103
      %1107 = vset.pattern.permute.xlu0 2
      %1108 = vperm.xlu0 %1107, %v1070
      %v1109 = vpop.permute.xlu0 %1108
      %1112 = vset.pattern.permute.xlu0 2
      %1113 = vperm.xlu0 %1112, %v1071
      %v1114 = vpop.permute.xlu0 %1113
      %1117 = vset.pattern.permute.xlu0 2
      %1118 = vperm.xlu0 %1117, %v1072
      %v1119 = vpop.permute.xlu0 %1118
      %1122 = vset.pattern.permute.xlu0 2
      %1123 = vperm.xlu0 %1122, %v1073
      %v1124 = vpop.permute.xlu0 %1123
      %1127 = vset.pattern.permute.xlu0 2
      %1128 = vperm.xlu0 %1127, %v1074
      %v1129 = vpop.permute.xlu0 %1128
      %1132 = vset.pattern.permute.xlu0 2
      %1133 = vperm.xlu0 %1132, %v1075
      %v1134 = vpop.permute.xlu0 %1133
      %1137 = vset.pattern.permute.xlu0 2
      %1138 = vperm.xlu0 %1137, %v1076
      %v1139 = vpop.permute.xlu0 %1138
      %1142 = vset.pattern.permute.xlu0 2
      %1143 = vperm.xlu0 %1142, %v1077
      %v1144 = vpop.permute.xlu0 %1143
      %1147 = vset.pattern.permute.xlu0 2
      %1148 = vperm.xlu0 %1147, %v1078
      %v1149 = vpop.permute.xlu0 %1148
      %1152 = vset.pattern.permute.xlu0 2
      %1153 = vperm.xlu0 %1152, %v1079
      %v1154 = vpop.permute.xlu0 %1153
      %1157 = vset.pattern.permute.xlu0 2
      %1158 = vperm.xlu0 %1157, %v1080
      %v1159 = vpop.permute.xlu0 %1158
      %v1161 = vadd.f32 %v969, %v1084
      %v1162 = vadd.f32 %v970, %v1089
      %v1163 = vadd.f32 %v971, %v1094
      %v1164 = vadd.f32 %v972, %v1099
      %v1165 = vadd.f32 %v973, %v1104
      %v1166 = vadd.f32 %v974, %v1109
      %v1167 = vadd.f32 %v975, %v1114
      %v1168 = vadd.f32 %v976, %v1119
      %v1169 = vadd.f32 %v977, %v1124
      %v1170 = vadd.f32 %v978, %v1129
      %v1171 = vadd.f32 %v979, %v1134
      %v1172 = vadd.f32 %v980, %v1139
      %v1173 = vadd.f32 %v981, %v1144
      %v1174 = vadd.f32 %v982, %v1149
      %v1175 = vadd.f32 %v983, %v1154
      %v1176 = vadd.f32 %v984, %v1159
      %v1177 = vld [vmem:[%s3] sm:$0xff]
      %v1178 = vld [vmem:[%s3 + $0x8] sm:$0xff]
      %v1179 = vld [vmem:[%s3 + $0x10] sm:$0xff]
      %v1180 = vld [vmem:[%s3 + $0x18] sm:$0xff]
      %v1181 = vld [vmem:[%s3 + $0x20] sm:$0x7]
      %1182 = vset.pattern.permute.xlu0 3
      %1183 = vperm.xlu0 %1182, %v302
      %v1184 = vpop.permute.xlu0 %1183
      %1186 = vset.pattern.permute.xlu0 3
      %1187 = vperm.xlu0 %1186, %v303
      %v1188 = vpop.permute.xlu0 %1187
      %1190 = vset.pattern.permute.xlu0 3
      %1191 = vperm.xlu0 %1190, %v304
      %v1192 = vpop.permute.xlu0 %1191
      %1194 = vset.pattern.permute.xlu0 3
      %1195 = vperm.xlu0 %1194, %v305
      %v1196 = vpop.permute.xlu0 %1195
      %1198 = vset.pattern.permute.xlu0 3
      %1199 = vperm.xlu0 %1198, %v306
      %v1200 = vpop.permute.xlu0 %1199
      %1202 = vmatprep.subr.mxu0 0.0
      %1203 = vmatpush1.msra.mxu0 %v1161
      %1204 = vmatprep.subr.mxu0 0.0
      %1205 = vmatpush1.msra.mxu0 %v1162
      %1206 = vmatprep.subr.mxu0 0.0
      %1207 = vmatpush1.msra.mxu0 %v1163
      %1208 = vmatprep.subr.mxu0 0.0
      %1209 = vmatpush1.msra.mxu0 %v1164
      %1210 = vmatprep.subr.mxu0 0.0
      %1211 = vmatpush1.msra.mxu0 %v1165
      %1212 = vmatprep.subr.mxu0 0.0
      %1213 = vmatpush1.msra.mxu0 %v1166
      %1214 = vmatprep.subr.mxu0 0.0
      %1215 = vmatpush1.msra.mxu0 %v1167
      %1216 = vmatprep.subr.mxu0 0.0
      %1217 = vmatpush1.msra.mxu0 %v1168
      %1218 = vmatprep.subr.mxu0 0.0
      %1219 = vmatpush1.msra.mxu0 %v1169
      %1220 = vmatprep.subr.mxu0 0.0
      %1221 = vmatpush1.msra.mxu0 %v1170
      %1222 = vmatprep.subr.mxu0 0.0
      %1223 = vmatpush1.msra.mxu0 %v1171
      %1224 = vmatprep.subr.mxu0 0.0
      %1225 = vmatpush1.msra.mxu0 %v1172
      %1226 = vmatprep.subr.mxu0 0.0
      %1227 = vmatpush1.msra.mxu0 %v1173
      %1228 = vmatprep.subr.mxu0 0.0
      %1229 = vmatpush1.msra.mxu0 %v1174
      %1230 = vmatprep.subr.mxu0 0.0
      %1231 = vmatpush1.msra.mxu0 %v1175
      %1232 = vmatprep.subr.mxu0 0.0
      %1233 = vmatpush1.msra.mxu0 %v1176
      %1234 = vmatprep.subr.mxu0 0.0
      %1235 = vmatpush1.msra.mxu0 0.0
      %1236 = vmatprep.subr.mxu0 0.0
      %1237 = vmatpush1.msra.mxu0 0.0
      %1238 = vmatprep.subr.mxu0 0.0
      %1239 = vmatpush1.msra.mxu0 0.0
      %1240 = vmatprep.subr.mxu0 0.0
      %1241 = vmatpush1.msra.mxu0 0.0
      %1242 = vmatprep.subr.mxu0 0.0
      %1243 = vmatpush1.msra.mxu0 0.0
      %1244 = vmatprep.subr.mxu0 0.0
      %1245 = vmatpush1.msra.mxu0 0.0
      %1246 = vmatprep.subr.mxu0 0.0
      %1247 = vmatpush1.msra.mxu0 0.0
      %1248 = vmatprep.subr.mxu0 0.0
      %1249 = vmatpush1.msra.mxu0 0.0
      %1250 = vmatprep.subr.mxu0 0.0
      %1251 = vmatpush1.msra.mxu0 0.0
      %1252 = vmatprep.subr.mxu0 0.0
      %1253 = vmatpush1.msra.mxu0 0.0
      %1254 = vmatprep.subr.mxu0 0.0
      %1255 = vmatpush1.msra.mxu0 0.0
      %1256 = vmatprep.subr.mxu0 0.0
      %1257 = vmatpush1.msra.mxu0 0.0
      %1258 = vmatprep.subr.mxu0 0.0
      %1259 = vmatpush1.msra.mxu0 0.0
      %1260 = vmatprep.subr.mxu0 0.0
      %1261 = vmatpush1.msra.mxu0 0.0
      %1262 = vmatprep.subr.mxu0 0.0
      %1263 = vmatpush1.msra.mxu0 0.0
      %1264 = vmatprep.subr.mxu0 0.0
      %1265 = vmatpush1.msra.mxu0 0.0
      %1266 = vmatprep.mubr.f32.mxu0 0.0
      %1267 = vmatmul.mubr.f32.gmra.mrb[0].mxu0 %v1177
      %v1268 = vpop.f32.mrb[0].mxu0
      %v1269 = vadd.f32 %v1184, %v1268
      %v1270 = vpop.f32.mrb[0].mxu0
      %1271 = vmatprep.mubr.f32.mxu0 0.0
      %1272 = vmatmul.mubr.f32.gmra.mrb[0].mxu0 %v1178
      %v1273 = vpop.f32.mrb[0].mxu0
      %v1274 = vadd.f32 %v1188, %v1273
      %v1275 = vpop.f32.mrb[0].mxu0
      %1276 = vmatprep.mubr.f32.mxu0 0.0
      %1277 = vmatmul.mubr.f32.gmra.mrb[0].mxu0 %v1179
      %v1278 = vpop.f32.mrb[0].mxu0
      %v1279 = vadd.f32 %v1192, %v1278
      %v1280 = vpop.f32.mrb[0].mxu0
      %1281 = vmatprep.mubr.f32.mxu0 0.0
      %1282 = vmatmul.mubr.f32.gmra.mrb[0].mxu0 %v1180
      %v1283 = vpop.f32.mrb[0].mxu0
      %v1284 = vadd.f32 %v1196, %v1283
      %v1285 = vpop.f32.mrb[0].mxu0
      %1286 = vmatprep.mubr.f32.mxu0 0.0
      %1287 = vmatmul.mubr.f32.gmra.mrb[0].mxu0 %v1181
      %v1288 = vpop.f32.mrb[0].mxu0
      %v1289 = vadd.f32 %v1200, %v1288
      %v1290 = vpop.f32.mrb[0].mxu0
      %1291 = vdwg.mxu0
      %vm1292 = vcmp.gt.f32.partialorder %v1269, 0.0
      %vm1293 = vcmp.gt.f32.partialorder %v1274, 0.0
      %vm1294 = vcmp.gt.f32.partialorder %v1279, 0.0
      %vm1295 = vcmp.gt.f32.partialorder %v1284, 0.0
      %vm1296 = vcmp.gt.f32.partialorder %v1289, 0.0
      %v1297 = vmul.f32 %v1269, 0.01
      %v1298 = vmul.f32 %v1274, 0.01
      %v1299 = vmul.f32 %v1279, 0.01
      %v1300 = vmul.f32 %v1284, 0.01
      %v1301 = vmul.f32 %v1289, 0.01
      %v1302 = vsel %vm1292, %v1269, %v1297
      %v1303 = vsel %vm1293, %v1274, %v1298
      %v1304 = vsel %vm1294, %v1279, %v1299
      %v1305 = vsel %vm1295, %v1284, %v1300
      %v1306 = vsel %vm1296, %v1289, %v1301
      %v1307 = vsel %vm663, %v1302, 0.0
      %1308 = vadd.xlane.f32.xlu0 %v1307
      %v1309 = vpop.xlane.xlu0 %1308
      %v1310 = vsel %vm663, %v1303, 0.0
      %1311 = vadd.xlane.f32.xlu0 %v1310
      %v1312 = vpop.xlane.xlu0 %1311
      %v1313 = vsel %vm663, %v1304, 0.0
      %1314 = vadd.xlane.f32.xlu0 %v1313
      %v1315 = vpop.xlane.xlu0 %1314
      %v1316 = vsel %vm663, %v1305, 0.0
      %1317 = vadd.xlane.f32.xlu0 %v1316
      %v1318 = vpop.xlane.xlu0 %1317
      %vm1319 = vcmask 337920
      %v1320 = vsel %vm1319, %v1306, 0.0
      %1321 = vadd.xlane.f32.xlu0 %v1320
      %v1322 = vpop.xlane.xlu0 %1321
      %v1323 = vmul.f32 %v1309, %v712
      %v1324 = vmul.f32 %v1312, %v712
      %v1325 = vmul.f32 %v1315, %v712
      %v1326 = vmul.f32 %v1318, %v712
      %v1327 = vmul.f32 %v1322, %v712
      %v1328 = vmul.f32 %v1302, %v1302
      %v1329 = vmul.f32 %v1303, %v1303
      %v1330 = vmul.f32 %v1304, %v1304
      %v1331 = vmul.f32 %v1305, %v1305
      %v1332 = vmul.f32 %v1306, %v1306
      %v1333 = vsel %vm663, %v1328, 0.0
      %1334 = vadd.xlane.f32.xlu0 %v1333
      %v1335 = vpop.xlane.xlu0 %1334
      %v1336 = vsel %vm663, %v1329, 0.0
      %1337 = vadd.xlane.f32.xlu0 %v1336
      %v1338 = vpop.xlane.xlu0 %1337
      %v1339 = vsel %vm663, %v1330, 0.0
      %1340 = vadd.xlane.f32.xlu0 %v1339
      %v1341 = vpop.xlane.xlu0 %1340
      %v1342 = vsel %vm663, %v1331, 0.0
      %1343 = vadd.xlane.f32.xlu0 %v1342
      %v1344 = vpop.xlane.xlu0 %1343
      %v1345 = vsel %vm1319, %v1332, 0.0
      %1346 = vadd.xlane.f32.xlu0 %v1345
      %v1347 = vpop.xlane.xlu0 %1346
      %v1348 = vmul.f32 %v1335, %v712
      %v1349 = vmul.f32 %v1338, %v712
      %v1350 = vmul.f32 %v1341, %v712
      %v1351 = vmul.f32 %v1344, %v712
      %v1352 = vmul.f32 %v1347, %v712
      %v1353 = vmul.f32 %v1323, %v1323
      %v1354 = vmul.f32 %v1324, %v1324
      %v1355 = vmul.f32 %v1325, %v1325
      %v1356 = vmul.f32 %v1326, %v1326
      %v1357 = vmul.f32 %v1327, %v1327
      %v1358 = vsub.f32 %v1348, %v1353
      %v1359 = vsub.f32 %v1349, %v1354
      %v1360 = vsub.f32 %v1350, %v1355
      %v1361 = vsub.f32 %v1351, %v1356
      %v1362 = vsub.f32 %v1352, %v1357
      %v1363 = vadd.f32 %v1358, 1e-05
      %v1364 = vadd.f32 %v1359, 1e-05
      %v1365 = vadd.f32 %v1360, 1e-05
      %v1366 = vadd.f32 %v1361, 1e-05
      %v1367 = vadd.f32 %v1362, 1e-05
      %v1368 = vrsqrt.pop %v1363
      %v1369 = vrsqrt.pop %v1364
      %v1370 = vrsqrt.pop %v1365
      %v1371 = vrsqrt.pop %v1366
      %v1372 = vrsqrt.pop %v1367
      %v1373 = vmul.f32 %v1368, %v302
      %v1374 = vmul.f32 %v1369, %v303
      %v1375 = vmul.f32 %v1370, %v304
      %v1376 = vmul.f32 %v1371, %v305
      %v1377 = vmul.f32 %v1372, %v306
      %1379 = vset.pattern.permute.xlu0 4
      %1380 = vperm.xlu0 %1379, %v1373
      %v1381 = vpop.permute.xlu0 %1380
      %1384 = vset.pattern.permute.xlu0 4
      %1385 = vperm.xlu0 %1384, %v1374
      %v1386 = vpop.permute.xlu0 %1385
      %1389 = vset.pattern.permute.xlu0 4
      %1390 = vperm.xlu0 %1389, %v1375
      %v1391 = vpop.permute.xlu0 %1390
      %1394 = vset.pattern.permute.xlu0 4
      %1395 = vperm.xlu0 %1394, %v1376
      %v1396 = vpop.permute.xlu0 %1395
      %1399 = vset.pattern.permute.xlu0 4
      %1400 = vperm.xlu0 %1399, %v1377
      %v1401 = vpop.permute.xlu0 %1400
      %v1403 = vmul.f32 %v1302, %v1381
      %v1404 = vmul.f32 %v1303, %v1386
      %v1405 = vmul.f32 %v1304, %v1391
      %v1406 = vmul.f32 %v1305, %v1396
      %v1407 = vmul.f32 %v1306, %v1401
      %v1408 = vmul.f32 %v1323, %v1373
      %v1409 = vmul.f32 %v1324, %v1374
      %v1410 = vmul.f32 %v1325, %v1375
      %v1411 = vmul.f32 %v1326, %v1376
      %v1412 = vmul.f32 %v1327, %v1377
      %1418 = vrot.lane.b32.xlu0 %v1408, 1
      %v1419 = vpop.permute.xlu0 %1418
      %1420 = vrot.lane.b32.xlu0 %v1409, 1
      %v1421 = vpop.permute.xlu0 %1420
      %1422 = vrot.lane.b32.xlu0 %v1410, 1
      %v1423 = vpop.permute.xlu0 %1422
      %1424 = vrot.lane.b32.xlu0 %v1411, 1
      %v1425 = vpop.permute.xlu0 %1424
      %1426 = vrot.lane.b32.xlu0 %v1412, 1
      %v1427 = vpop.permute.xlu0 %1426
      %v1433 = vsub.f32 %v302, %v1419
      %v1434 = vsub.f32 %v303, %v1421
      %v1435 = vsub.f32 %v304, %v1423
      %v1436 = vsub.f32 %v305, %v1425
      %v1437 = vsub.f32 %v306, %v1427
      %1439 = vset.pattern.permute.xlu0 5
      %1440 = vperm.xlu0 %1439, %v1433
      %v1441 = vpop.permute.xlu0 %1440
      %1444 = vset.pattern.permute.xlu0 5
      %1445 = vperm.xlu0 %1444, %v1434
      %v1446 = vpop.permute.xlu0 %1445
      %1449 = vset.pattern.permute.xlu0 5
      %1450 = vperm.xlu0 %1449, %v1435
      %v1451 = vpop.permute.xlu0 %1450
      %1454 = vset.pattern.permute.xlu0 5
      %1455 = vperm.xlu0 %1454, %v1436
      %v1456 = vpop.permute.xlu0 %1455
      %1459 = vset.pattern.permute.xlu0 5
      %1460 = vperm.xlu0 %1459, %v1437
      %v1461 = vpop.permute.xlu0 %1460
      %v1463 = vadd.f32 %v1403, %v1441
      %v1464 = vadd.f32 %v1404, %v1446
      %v1465 = vadd.f32 %v1405, %v1451
      %v1466 = vadd.f32 %v1406, %v1456
      %v1467 = vadd.f32 %v1407, %v1461
      %v1468 = vld [vmem:[%s4] sm:$0xff]
      %v1469 = vld [vmem:[%s4 + $0x8] sm:$0xff]
      %v1470 = vld [vmem:[%s4 + $0x10] sm:$0xff]
      %v1471 = vld [vmem:[%s4 + $0x18] sm:$0xff]
      %v1472 = vld [vmem:[%s4 + $0x20] sm:$0xff]
      %v1473 = vld [vmem:[%s4 + $0x28] sm:$0xff]
      %v1474 = vld [vmem:[%s4 + $0x30] sm:$0xff]
      %v1475 = vld [vmem:[%s4 + $0x38] sm:$0xff]
      %v1476 = vld [vmem:[%s4 + $0x40] sm:$0xff]
      %v1477 = vld [vmem:[%s4 + $0x48] sm:$0xff]
      %v1478 = vld [vmem:[%s4 + $0x50] sm:$0xff]
      %v1479 = vld [vmem:[%s4 + $0x58] sm:$0xff]
      %v1480 = vld [vmem:[%s4 + $0x60] sm:$0xff]
      %v1481 = vld [vmem:[%s4 + $0x68] sm:$0xff]
      %v1482 = vld [vmem:[%s4 + $0x70] sm:$0xff]
      %v1483 = vld [vmem:[%s4 + $0x78] sm:$0x3]
      %v1484 = vld [vmem:[%s4 + $0x80] sm:$0x3]
      %v1485 = vld [vmem:[%s4 + $0x88] sm:$0x3]
      %v1487 = vsel %vm663, %v1463, 0
      %v1490 = vsel %vm663, %v1464, 0
      %v1493 = vsel %vm663, %v1465, 0
      %v1496 = vsel %vm663, %v1466, 0
      %v1499 = vsel %vm663, %v1467, 0
      %v1502 = vsel %vm466, %v1483, 0
      %v1505 = vsel %vm466, %v1484, 0
      %v1508 = vsel %vm466, %v1485, 0
      %1510 = vmatprep.subr.mxu0 %v1469
      %1511 = vmatpush1.msra.mxu0 %v1468
      %1512 = vmatprep.subr.mxu0 %v1472
      %1513 = vmatpush1.msra.mxu0 %v1471
      %1514 = vmatprep.subr.mxu0 %v1475
      %1515 = vmatpush1.msra.mxu0 %v1474
      %1516 = vmatprep.subr.mxu0 %v1478
      %1517 = vmatpush1.msra.mxu0 %v1477
      %1518 = vmatprep.subr.mxu0 %v1481
      %1519 = vmatpush1.msra.mxu0 %v1480
      %1520 = vmatprep.subr.mxu0 %v1505
      %1521 = vmatpush1.msra.mxu0 %v1502
      %1522 = vmatprep.subr.mxu0 0.0
      %1523 = vmatpush1.msra.mxu0 0.0
      %1524 = vmatprep.subr.mxu0 0.0
      %1525 = vmatpush1.msra.mxu0 0.0
      %1526 = vmatprep.subr.mxu0 0.0
      %1527 = vmatpush1.msra.mxu0 0.0
      %1528 = vmatprep.subr.mxu0 0.0
      %1529 = vmatpush1.msra.mxu0 0.0
      %1530 = vmatprep.subr.mxu0 0.0
      %1531 = vmatpush1.msra.mxu0 0.0
      %1532 = vmatprep.subr.mxu0 0.0
      %1533 = vmatpush1.msra.mxu0 0.0
      %1534 = vmatprep.subr.mxu0 0.0
      %1535 = vmatpush1.msra.mxu0 0.0
      %1536 = vmatprep.subr.mxu0 0.0
      %1537 = vmatpush1.msra.mxu0 0.0
      %1538 = vmatprep.subr.mxu0 0.0
      %1539 = vmatpush1.msra.mxu0 0.0
      %1540 = vmatprep.subr.mxu0 0.0
      %1541 = vmatpush1.msra.mxu0 0.0
      %1542 = vmatprep.subr.mxu0 0.0
      %1543 = vmatpush1.msra.mxu0 0.0
      %1544 = vmatprep.subr.mxu0 0.0
      %1545 = vmatpush1.msra.mxu0 0.0
      %1546 = vmatprep.subr.mxu0 0.0
      %1547 = vmatpush1.msra.mxu0 0.0
      %1548 = vmatprep.subr.mxu0 0.0
      %1549 = vmatpush1.msra.mxu0 0.0
      %1550 = vmatprep.subr.mxu0 0.0
      %1551 = vmatpush1.msra.mxu0 0.0
      %1552 = vmatprep.subr.mxu0 0.0
      %1553 = vmatpush1.msra.mxu0 0.0
      %1554 = vmatprep.subr.mxu0 0.0
      %1555 = vmatpush1.msra.mxu0 0.0
      %1556 = vmatprep.subr.mxu0 0.0
      %1557 = vmatpush1.msra.mxu0 0.0
      %1558 = vmatprep.subr.mxu0 0.0
      %1559 = vmatpush1.msra.mxu0 0.0
      %1560 = vmatprep.subr.mxu0 0.0
      %1561 = vmatpush1.msra.mxu0 0.0
      %1562 = vmatprep.subr.mxu0 0.0
      %1563 = vmatpush1.msra.mxu0 0.0
      %1564 = vmatprep.subr.mxu0 0.0
      %1565 = vmatpush1.msra.mxu0 0.0
      %1566 = vmatprep.subr.mxu0 0.0
      %1567 = vmatpush1.msra.mxu0 0.0
      %1568 = vmatprep.subr.mxu0 0.0
      %1569 = vmatpush1.msra.mxu0 0.0
      %1570 = vmatprep.subr.mxu0 0.0
      %1571 = vmatpush1.msra.mxu0 0.0
      %1572 = vmatprep.subr.mxu0 0.0
      %1573 = vmatpush1.msra.mxu0 0.0
      %1574 = vmatprep.mubr.f32.mxu0 0.0
      %1575 = vmatmul.mubr.f32.gmra.mrb[0].mxu0 %v1487
      %v1576 = vpop.f32.mrb[0].mxu0
      %v1577 = vadd.f32 0.0, %v1576
      %v1578 = vpop.f32.mrb[0].mxu0
      %v1579 = vadd.f32 0.0, %v1578
      %1580 = vmatprep.mubr.f32.mxu0 0.0
      %1581 = vmatmul.mubr.f32.gmra.mrb[0].mxu0 %v1490
      %v1582 = vpop.f32.mrb[0].mxu0
      %v1583 = vadd.f32 0.0, %v1582
      %v1584 = vpop.f32.mrb[0].mxu0
      %v1585 = vadd.f32 0.0, %v1584
      %1586 = vmatprep.mubr.f32.mxu0 0.0
      %1587 = vmatmul.mubr.f32.gmra.mrb[0].mxu0 %v1493
      %v1588 = vpop.f32.mrb[0].mxu0
      %v1589 = vadd.f32 0.0, %v1588
      %v1590 = vpop.f32.mrb[0].mxu0
      %v1591 = vadd.f32 0.0, %v1590
      %1592 = vmatprep.mubr.f32.mxu0 0.0
      %1593 = vmatmul.mubr.f32.gmra.mrb[0].mxu0 %v1496
      %v1594 = vpop.f32.mrb[0].mxu0
      %v1595 = vadd.f32 0.0, %v1594
      %v1596 = vpop.f32.mrb[0].mxu0
      %v1597 = vadd.f32 0.0, %v1596
      %1598 = vmatprep.mubr.f32.mxu0 0.0
      %1599 = vmatmul.mubr.f32.gmra.mrb[0].mxu0 %v1499
      %v1600 = vpop.f32.mrb[0].mxu0
      %v1601 = vadd.f32 0.0, %v1600
      %v1602 = vpop.f32.mrb[0].mxu0
      %v1603 = vadd.f32 0.0, %v1602
      %1604 = vdwg.mxu0
      %1605 = vmatprep.subr.mxu0 0.0
      %1606 = vmatpush1.msra.mxu0 %v1470
      %1607 = vmatprep.subr.mxu0 0.0
      %1608 = vmatpush1.msra.mxu0 %v1473
      %1609 = vmatprep.subr.mxu0 0.0
      %1610 = vmatpush1.msra.mxu0 %v1476
      %1611 = vmatprep.subr.mxu0 0.0
      %1612 = vmatpush1.msra.mxu0 %v1479
      %1613 = vmatprep.subr.mxu0 0.0
      %1614 = vmatpush1.msra.mxu0 %v1482
      %1615 = vmatprep.subr.mxu0 0.0
      %1616 = vmatpush1.msra.mxu0 %v1508
      %1617 = vmatprep.subr.mxu0 0.0
      %1618 = vmatpush1.msra.mxu0 0.0
      %1619 = vmatprep.subr.mxu0 0.0
      %1620 = vmatpush1.msra.mxu0 0.0
      %1621 = vmatprep.subr.mxu0 0.0
      %1622 = vmatpush1.msra.mxu0 0.0
      %1623 = vmatprep.subr.mxu0 0.0
      %1624 = vmatpush1.msra.mxu0 0.0
      %1625 = vmatprep.subr.mxu0 0.0
      %1626 = vmatpush1.msra.mxu0 0.0
      %1627 = vmatprep.subr.mxu0 0.0
      %1628 = vmatpush1.msra.mxu0 0.0
      %1629 = vmatprep.subr.mxu0 0.0
      %1630 = vmatpush1.msra.mxu0 0.0
      %1631 = vmatprep.subr.mxu0 0.0
      %1632 = vmatpush1.msra.mxu0 0.0
      %1633 = vmatprep.subr.mxu0 0.0
      %1634 = vmatpush1.msra.mxu0 0.0
      %1635 = vmatprep.subr.mxu0 0.0
      %1636 = vmatpush1.msra.mxu0 0.0
      %1637 = vmatprep.subr.mxu0 0.0
      %1638 = vmatpush1.msra.mxu0 0.0
      %1639 = vmatprep.subr.mxu0 0.0
      %1640 = vmatpush1.msra.mxu0 0.0
      %1641 = vmatprep.subr.mxu0 0.0
      %1642 = vmatpush1.msra.mxu0 0.0
      %1643 = vmatprep.subr.mxu0 0.0
      %1644 = vmatpush1.msra.mxu0 0.0
      %1645 = vmatprep.subr.mxu0 0.0
      %1646 = vmatpush1.msra.mxu0 0.0
      %1647 = vmatprep.subr.mxu0 0.0
      %1648 = vmatpush1.msra.mxu0 0.0
      %1649 = vmatprep.subr.mxu0 0.0
      %1650 = vmatpush1.msra.mxu0 0.0
      %1651 = vmatprep.subr.mxu0 0.0
      %1652 = vmatpush1.msra.mxu0 0.0
      %1653 = vmatprep.subr.mxu0 0.0
      %1654 = vmatpush1.msra.mxu0 0.0
      %1655 = vmatprep.subr.mxu0 0.0
      %1656 = vmatpush1.msra.mxu0 0.0
      %1657 = vmatprep.subr.mxu0 0.0
      %1658 = vmatpush1.msra.mxu0 0.0
      %1659 = vmatprep.subr.mxu0 0.0
      %1660 = vmatpush1.msra.mxu0 0.0
      %1661 = vmatprep.subr.mxu0 0.0
      %1662 = vmatpush1.msra.mxu0 0.0
      %1663 = vmatprep.subr.mxu0 0.0
      %1664 = vmatpush1.msra.mxu0 0.0
      %1665 = vmatprep.subr.mxu0 0.0
      %1666 = vmatpush1.msra.mxu0 0.0
      %1667 = vmatprep.subr.mxu0 0.0
      %1668 = vmatpush1.msra.mxu0 0.0
      %1669 = vmatprep.mubr.f32.mxu0 0.0
      %1670 = vmatmul.mubr.f32.gmra.mrb[0].mxu0 %v1487
      %v1671 = vpop.f32.mrb[0].mxu0
      %v1672 = vadd.f32 0.0, %v1671
      %v1673 = vpop.f32.mrb[0].mxu0
      %1674 = vmatprep.mubr.f32.mxu0 0.0
      %1675 = vmatmul.mubr.f32.gmra.mrb[0].mxu0 %v1490
      %v1676 = vpop.f32.mrb[0].mxu0
      %v1677 = vadd.f32 0.0, %v1676
      %v1678 = vpop.f32.mrb[0].mxu0
      %1679 = vmatprep.mubr.f32.mxu0 0.0
      %1680 = vmatmul.mubr.f32.gmra.mrb[0].mxu0 %v1493
      %v1681 = vpop.f32.mrb[0].mxu0
      %v1682 = vadd.f32 0.0, %v1681
      %v1683 = vpop.f32.mrb[0].mxu0
      %1684 = vmatprep.mubr.f32.mxu0 0.0
      %1685 = vmatmul.mubr.f32.gmra.mrb[0].mxu0 %v1496
      %v1686 = vpop.f32.mrb[0].mxu0
      %v1687 = vadd.f32 0.0, %v1686
      %v1688 = vpop.f32.mrb[0].mxu0
      %1689 = vmatprep.mubr.f32.mxu0 0.0
      %1690 = vmatmul.mubr.f32.gmra.mrb[0].mxu0 %v1499
      %v1691 = vpop.f32.mrb[0].mxu0
      %v1692 = vadd.f32 0.0, %v1691
      %v1693 = vpop.f32.mrb[0].mxu0
      %1694 = vdwg.mxu0
      %v1695 = vld [vmem:[%s5] sm:$0xff]
      %v1696 = vld [vmem:[%s5 + $0x8] sm:$0xff]
      %v1697 = vld [vmem:[%s5 + $0x10] sm:$0xff]
      %v1698 = vld [vmem:[%s5 + $0x18] sm:$0xff]
      %v1699 = vld [vmem:[%s5 + $0x20] sm:$0xff]
      %v1700 = vld [vmem:[%s5 + $0x28] sm:$0xff]
      %v1701 = vld [vmem:[%s5 + $0x30] sm:$0xff]
      %v1702 = vld [vmem:[%s5 + $0x38] sm:$0xff]
      %v1703 = vld [vmem:[%s5 + $0x40] sm:$0xff]
      %v1704 = vld [vmem:[%s5 + $0x48] sm:$0xff]
      %v1705 = vld [vmem:[%s5 + $0x50] sm:$0xff]
      %v1706 = vld [vmem:[%s5 + $0x58] sm:$0xff]
      %v1707 = vld [vmem:[%s5 + $0x60] sm:$0x7]
      %v1708 = vld [vmem:[%s5 + $0x68] sm:$0x7]
      %v1709 = vld [vmem:[%s5 + $0x70] sm:$0x7]
      %v1710 = vmul.f32 %v1577, %v1695
      %v1711 = vmul.f32 %v1579, %v1696
      %v1712 = vmul.f32 %v1672, %v1697
      %v1713 = vmul.f32 %v1583, %v1698
      %v1714 = vmul.f32 %v1585, %v1699
      %v1715 = vmul.f32 %v1677, %v1700
      %v1716 = vmul.f32 %v1589, %v1701
      %v1717 = vmul.f32 %v1591, %v1702
      %v1718 = vmul.f32 %v1682, %v1703
      %v1719 = vmul.f32 %v1595, %v1704
      %v1720 = vmul.f32 %v1597, %v1705
      %v1721 = vmul.f32 %v1687, %v1706
      %v1722 = vmul.f32 %v1601, %v1707
      %v1723 = vmul.f32 %v1603, %v1708
      %v1724 = vmul.f32 %v1692, %v1709
      %v1725 = vld [vmem:[%s6] sm:$0xff]
      %v1726 = vld [vmem:[%s6 + $0x8] sm:$0xff]
      %v1727 = vld [vmem:[%s6 + $0x10] sm:$0xff]
      %v1728 = vld [vmem:[%s6 + $0x18] sm:$0xff]
      %v1729 = vld [vmem:[%s6 + $0x20] sm:$0xff]
      %v1730 = vld [vmem:[%s6 + $0x28] sm:$0xff]
      %v1731 = vld [vmem:[%s6 + $0x30] sm:$0xff]
      %v1732 = vld [vmem:[%s6 + $0x38] sm:$0xff]
      %v1733 = vld [vmem:[%s6 + $0x40] sm:$0xff]
      %v1734 = vld [vmem:[%s6 + $0x48] sm:$0xff]
      %v1735 = vld [vmem:[%s6 + $0x50] sm:$0xff]
      %v1736 = vld [vmem:[%s6 + $0x58] sm:$0xff]
      %v1737 = vld [vmem:[%s6 + $0x60] sm:$0xff]
      %v1738 = vld [vmem:[%s6 + $0x68] sm:$0xff]
      %v1739 = vld [vmem:[%s6 + $0x70] sm:$0xff]
      %v1740 = vld [vmem:[%s6 + $0x78] sm:$0xff]
      %v1741 = vld [vmem:[%s6 + $0x80] sm:$0xff]
      %v1742 = vld [vmem:[%s6 + $0x88] sm:$0xff]
      %v1743 = vld [vmem:[%s6 + $0x90] sm:$0xff]
      %v1744 = vld [vmem:[%s6 + $0x98] sm:$0xff]
      %v1745 = vld [vmem:[%s6 + $0xa0] sm:$0xff]
      %v1746 = vld [vmem:[%s6 + $0xa8] sm:$0xff]
      %v1747 = vld [vmem:[%s6 + $0xb0] sm:$0xff]
      %v1748 = vld [vmem:[%s6 + $0xb8] sm:$0xff]
      %v1749 = vld [vmem:[%s6 + $0xc0] sm:$0xff]
      %v1750 = vld [vmem:[%s6 + $0xc8] sm:$0xff]
      %v1751 = vld [vmem:[%s6 + $0xd0] sm:$0xff]
      %v1752 = vld [vmem:[%s6 + $0xd8] sm:$0xff]
      %v1753 = vld [vmem:[%s6 + $0xe0] sm:$0xff]
      %v1754 = vld [vmem:[%s6 + $0xe8] sm:$0xff]
      %v1755 = vld [vmem:[%s6 + $0xf0] sm:$0xff]
      %v1756 = vld [vmem:[%s6 + $0xf8] sm:$0xff]
      %v1757 = vld [vmem:[%s6 + $0x100] sm:$0xff]
      %v1758 = vld [vmem:[%s6 + $0x108] sm:$0xff]
      %v1759 = vld [vmem:[%s6 + $0x110] sm:$0xff]
      %v1760 = vld [vmem:[%s6 + $0x118] sm:$0xff]
      %v1761 = vld [vmem:[%s6 + $0x120] sm:$0xff]
      %v1762 = vld [vmem:[%s6 + $0x128] sm:$0xff]
      %v1763 = vld [vmem:[%s6 + $0x130] sm:$0xff]
      %v1764 = vld [vmem:[%s6 + $0x138] sm:$0xff]
      %vm1765 = vcmask 523264
      %v1767 = vsel %vm1765, %v1712, 0
      %v1770 = vsel %vm1765, %v1715, 0
      %v1773 = vsel %vm1765, %v1718, 0
      %v1776 = vsel %vm1765, %v1721, 0
      %v1779 = vsel %vm1765, %v1724, 0
      %1781 = vmatprep.subr.mxu0 0.0
      %1782 = vmatpush1.msra.mxu0 %v1725
      %1783 = vmatprep.subr.mxu0 0.0
      %1784 = vmatpush1.msra.mxu0 %v1726
      %1785 = vmatprep.subr.mxu0 0.0
      %1786 = vmatpush1.msra.mxu0 %v1727
      %1787 = vmatprep.subr.mxu0 0.0
      %1788 = vmatpush1.msra.mxu0 %v1728
      %1789 = vmatprep.subr.mxu0 0.0
      %1790 = vmatpush1.msra.mxu0 %v1729
      %1791 = vmatprep.subr.mxu0 0.0
      %1792 = vmatpush1.msra.mxu0 %v1730
      %1793 = vmatprep.subr.mxu0 0.0
      %1794 = vmatpush1.msra.mxu0 %v1731
      %1795 = vmatprep.subr.mxu0 0.0
      %1796 = vmatpush1.msra.mxu0 %v1732
      %1797 = vmatprep.subr.mxu0 0.0
      %1798 = vmatpush1.msra.mxu0 %v1733
      %1799 = vmatprep.subr.mxu0 0.0
      %1800 = vmatpush1.msra.mxu0 %v1734
      %1801 = vmatprep.subr.mxu0 0.0
      %1802 = vmatpush1.msra.mxu0 %v1735
      %1803 = vmatprep.subr.mxu0 0.0
      %1804 = vmatpush1.msra.mxu0 %v1736
      %1805 = vmatprep.subr.mxu0 0.0
      %1806 = vmatpush1.msra.mxu0 %v1737
      %1807 = vmatprep.subr.mxu0 0.0
      %1808 = vmatpush1.msra.mxu0 %v1738
      %1809 = vmatprep.subr.mxu0 0.0
      %1810 = vmatpush1.msra.mxu0 %v1739
      %1811 = vmatprep.subr.mxu0 0.0
      %1812 = vmatpush1.msra.mxu0 %v1740
      %1813 = vmatprep.subr.mxu0 0.0
      %1814 = vmatpush1.msra.mxu0 %v1741
      %1815 = vmatprep.subr.mxu0 0.0
      %1816 = vmatpush1.msra.mxu0 %v1742
      %1817 = vmatprep.subr.mxu0 0.0
      %1818 = vmatpush1.msra.mxu0 %v1743
      %1819 = vmatprep.subr.mxu0 0.0
      %1820 = vmatpush1.msra.mxu0 %v1744
      %1821 = vmatprep.subr.mxu0 0.0
      %1822 = vmatpush1.msra.mxu0 %v1745
      %1823 = vmatprep.subr.mxu0 0.0
      %1824 = vmatpush1.msra.mxu0 %v1746
      %1825 = vmatprep.subr.mxu0 0.0
      %1826 = vmatpush1.msra.mxu0 %v1747
      %1827 = vmatprep.subr.mxu0 0.0
      %1828 = vmatpush1.msra.mxu0 %v1748
      %1829 = vmatprep.subr.mxu0 0.0
      %1830 = vmatpush1.msra.mxu0 %v1749
      %1831 = vmatprep.subr.mxu0 0.0
      %1832 = vmatpush1.msra.mxu0 %v1750
      %1833 = vmatprep.subr.mxu0 0.0
      %1834 = vmatpush1.msra.mxu0 %v1751
      %1835 = vmatprep.subr.mxu0 0.0
      %1836 = vmatpush1.msra.mxu0 %v1752
      %1837 = vmatprep.subr.mxu0 0.0
      %1838 = vmatpush1.msra.mxu0 %v1753
      %1839 = vmatprep.subr.mxu0 0.0
      %1840 = vmatpush1.msra.mxu0 %v1754
      %1841 = vmatprep.subr.mxu0 0.0
      %1842 = vmatpush1.msra.mxu0 %v1755
      %1843 = vmatprep.subr.mxu0 0.0
      %1844 = vmatpush1.msra.mxu0 %v1756
      %1845 = vmatprep.mubr.f32.mxu0 %v1711
      %1846 = vmatmul.mubr.f32.gmra.mrb[0].mxu0 %v1710
      %v1847 = vpop.f32.mrb[0].mxu0
      %v1848 = vadd.f32 0.0, %v1847
      %v1849 = vpop.f32.mrb[0].mxu0
      %1850 = vmatprep.mubr.f32.mxu0 %v1714
      %1851 = vmatmul.mubr.f32.gmra.mrb[0].mxu0 %v1713
      %v1852 = vpop.f32.mrb[0].mxu0
      %v1853 = vadd.f32 0.0, %v1852
      %v1854 = vpop.f32.mrb[0].mxu0
      %1855 = vmatprep.mubr.f32.mxu0 %v1717
      %1856 = vmatmul.mubr.f32.gmra.mrb[0].mxu0 %v1716
      %v1857 = vpop.f32.mrb[0].mxu0
      %v1858 = vadd.f32 0.0, %v1857
      %v1859 = vpop.f32.mrb[0].mxu0
      %1860 = vmatprep.mubr.f32.mxu0 %v1720
      %1861 = vmatmul.mubr.f32.gmra.mrb[0].mxu0 %v1719
      %v1862 = vpop.f32.mrb[0].mxu0
      %v1863 = vadd.f32 0.0, %v1862
      %v1864 = vpop.f32.mrb[0].mxu0
      %1865 = vmatprep.mubr.f32.mxu0 %v1723
      %1866 = vmatmul.mubr.f32.gmra.mrb[0].mxu0 %v1722
      %v1867 = vpop.f32.mrb[0].mxu0
      %v1868 = vadd.f32 0.0, %v1867
      %v1869 = vpop.f32.mrb[0].mxu0
      %1870 = vdwg.mxu0
      %1871 = vmatprep.subr.mxu0 0.0
      %1872 = vmatpush1.msra.mxu0 %v1757
      %1873 = vmatprep.subr.mxu0 0.0
      %1874 = vmatpush1.msra.mxu0 %v1758
      %1875 = vmatprep.subr.mxu0 0.0
      %1876 = vmatpush1.msra.mxu0 %v1759
      %1877 = vmatprep.subr.mxu0 0.0
      %1878 = vmatpush1.msra.mxu0 %v1760
      %1879 = vmatprep.subr.mxu0 0.0
      %1880 = vmatpush1.msra.mxu0 %v1761
      %1881 = vmatprep.subr.mxu0 0.0
      %1882 = vmatpush1.msra.mxu0 %v1762
      %1883 = vmatprep.subr.mxu0 0.0
      %1884 = vmatpush1.msra.mxu0 %v1763
      %1885 = vmatprep.subr.mxu0 0.0
      %1886 = vmatpush1.msra.mxu0 %v1764
      %1887 = vmatprep.subr.mxu0 0.0
      %1888 = vmatpush1.msra.mxu0 0.0
      %1889 = vmatprep.subr.mxu0 0.0
      %1890 = vmatpush1.msra.mxu0 0.0
      %1891 = vmatprep.subr.mxu0 0.0
      %1892 = vmatpush1.msra.mxu0 0.0
      %1893 = vmatprep.subr.mxu0 0.0
      %1894 = vmatpush1.msra.mxu0 0.0
      %1895 = vmatprep.subr.mxu0 0.0
      %1896 = vmatpush1.msra.mxu0 0.0
      %1897 = vmatprep.subr.mxu0 0.0
      %1898 = vmatpush1.msra.mxu0 0.0
      %1899 = vmatprep.subr.mxu0 0.0
      %1900 = vmatpush1.msra.mxu0 0.0
      %1901 = vmatprep.subr.mxu0 0.0
      %1902 = vmatpush1.msra.mxu0 0.0
      %1903 = vmatprep.subr.mxu0 0.0
      %1904 = vmatpush1.msra.mxu0 0.0
      %1905 = vmatprep.subr.mxu0 0.0
      %1906 = vmatpush1.msra.mxu0 0.0
      %1907 = vmatprep.subr.mxu0 0.0
      %1908 = vmatpush1.msra.mxu0 0.0
      %1909 = vmatprep.subr.mxu0 0.0
      %1910 = vmatpush1.msra.mxu0 0.0
      %1911 = vmatprep.subr.mxu0 0.0
      %1912 = vmatpush1.msra.mxu0 0.0
      %1913 = vmatprep.subr.mxu0 0.0
      %1914 = vmatpush1.msra.mxu0 0.0
      %1915 = vmatprep.subr.mxu0 0.0
      %1916 = vmatpush1.msra.mxu0 0.0
      %1917 = vmatprep.subr.mxu0 0.0
      %1918 = vmatpush1.msra.mxu0 0.0
      %1919 = vmatprep.subr.mxu0 0.0
      %1920 = vmatpush1.msra.mxu0 0.0
      %1921 = vmatprep.subr.mxu0 0.0
      %1922 = vmatpush1.msra.mxu0 0.0
      %1923 = vmatprep.subr.mxu0 0.0
      %1924 = vmatpush1.msra.mxu0 0.0
      %1925 = vmatprep.subr.mxu0 0.0
      %1926 = vmatpush1.msra.mxu0 0.0
      %1927 = vmatprep.subr.mxu0 0.0
      %1928 = vmatpush1.msra.mxu0 0.0
      %1929 = vmatprep.subr.mxu0 0.0
      %1930 = vmatpush1.msra.mxu0 0.0
      %1931 = vmatprep.subr.mxu0 0.0
      %1932 = vmatpush1.msra.mxu0 0.0
      %1933 = vmatprep.subr.mxu0 0.0
      %1934 = vmatpush1.msra.mxu0 0.0
      %1935 = vmatprep.mubr.f32.mxu0 0.0
      %1936 = vmatmul.mubr.f32.gmra.mrb[0].mxu0 %v1767
      %v1937 = vpop.f32.mrb[0].mxu0
      %v1938 = vadd.f32 %v1848, %v1937
      %v1939 = vpop.f32.mrb[0].mxu0
      %1940 = vmatprep.mubr.f32.mxu0 0.0
      %1941 = vmatmul.mubr.f32.gmra.mrb[0].mxu0 %v1770
      %v1942 = vpop.f32.mrb[0].mxu0
      %v1943 = vadd.f32 %v1853, %v1942
      %v1944 = vpop.f32.mrb[0].mxu0
      %1945 = vmatprep.mubr.f32.mxu0 0.0
      %1946 = vmatmul.mubr.f32.gmra.mrb[0].mxu0 %v1773
      %v1947 = vpop.f32.mrb[0].mxu0
      %v1948 = vadd.f32 %v1858, %v1947
      %v1949 = vpop.f32.mrb[0].mxu0
      %1950 = vmatprep.mubr.f32.mxu0 0.0
      %1951 = vmatmul.mubr.f32.gmra.mrb[0].mxu0 %v1776
      %v1952 = vpop.f32.mrb[0].mxu0
      %v1953 = vadd.f32 %v1863, %v1952
      %v1954 = vpop.f32.mrb[0].mxu0
      %1955 = vmatprep.mubr.f32.mxu0 0.0
      %1956 = vmatmul.mubr.f32.gmra.mrb[0].mxu0 %v1779
      %v1957 = vpop.f32.mrb[0].mxu0
      %v1958 = vadd.f32 %v1868, %v1957
      %v1959 = vpop.f32.mrb[0].mxu0
      %1960 = vdwg.mxu0
      %v1961 = vadd.f32 %v1938, %v1943
      %v1962 = vadd.f32 %v1961, %v1948
      %v1963 = vadd.f32 %v1962, %v1953
      %vm1964 = vcmask 1042432
      %v1965 = vsel %vm1964, %v1958, 0.0
      %v1966 = vadd.f32 %v1963, %v1965
      %v1967 = vrot.slane %v1966, 4
      %v1968 = vadd.f32 %v1966, %v1967
      %v1969 = vrot.slane %v1968, 2
      %v1970 = vadd.f32 %v1968, %v1969
      %v1971 = vrot.slane %v1970, 1
      %v1972 = vadd.f32 %v1970, %v1971
      %v1973 = vld [vmem:[%s7] sm:$0x1]
      %v1974 = vadd.f32 %v1972, %v1973
      %vm1975 = vcmp.gt.f32.partialorder %v1974, 0.0
      %v1976 = vmul.f32 %v1974, 0.01
      %v1977 = vsel %vm1975, %v1974, %v1976
      %v1979 = vlaneseq
      %v1980 = vshrl.u32 %v1979, 7
      %v1981 = vsub.s32 0, %v1980
      %v1982 = vrot.slane %v1973, %v1981
      %1983 = vrot.lane.b32.xlu0 %v1982, 96
      %v1984 = vpop.permute.xlu0 %1983
      %v1986 = vmul.f32 %v1977, %v1984
      %1988 = vrot.lane.b32.xlu0 %v1986, 96
      %v1989 = vpop.permute.xlu0 %1988
      %vm1991 = vcmask 253952
      %v1992 = vsel %vm1991, %v1989, 0.0
      %1993 = vadd.xlane.f32.xlu0 %v1992
      %v1994 = vpop.xlane.xlu0 %1993
      %1995 = vrot.lane.b32.xlu0 %v1982, 121
      %v1996 = vpop.permute.xlu0 %1995
      %v1998 = vadd.f32 %v1994, %v1996
      %v1999 = vlaneseq
      %v2000 = vand.u32 %v1999, 127
      %vm2001 = vcmp.lt.s32.totalorder %v2000, 7
      %v2002 = vsel %vm2001, %v1974, 0.0
      %vm2003 = vcmp.eq.s32.totalorder %v2000, 7
      %2005 = vset.pattern.permute.xlu0 0
      %2006 = vperm.xlu0 %2005, %v1998
      %v2007 = vpop.permute.xlu0 %2006
      %v2009 = vsel %vm2003, %v2007, %v2002
      %2010 = vst [vmem:[%s301] sm:$0x1] %v2009
      %p2011 = scmp.lt.s32.totalorder %s19, 7
      %s2012 = scalar_select %p2011, %s19, 7
      %s2013 = scalar_lea.vmem %s8, %s2012
      // Predicated region
      $region53: #{connnet_forward_pallas.1} parent=51 // pred_check
        %p2014 = pneg %p210
      $region54: #{connnet_forward_pallas.1} parent=51 // pred_check_branch
        %2016 = sbr.rel (%p2014) target = $region56
      $region55: #{connnet_forward_pallas.1} parent=51 // pred_region
        _
      $region56: #{connnet_forward_pallas.1} parent=51 // pred_fallthru
        _
    $region52: #{connnet_forward_pallas.1} parent=5 // pred_fallthru
      _
    %p2017 = scmp.le.s32.totalorder 2, %s14
    // Predicated region
    $region57: #{connnet_forward_pallas.1} parent=5 // pred_check
      %p2018 = pneg %p2017
    $region58: #{connnet_forward_pallas.1} parent=5 // pred_check_branch
      %2020 = sbr.rel (%p2018) target = $region60
    $region59: #{connnet_forward_pallas.1} parent=5 // pred_region
      %s2021 = ssub.s32 %s14, 2
      // Predicated region
      $region61: #{connnet_forward_pallas.1} parent=59 // pred_check
        %p2022 = pneg %p216
      $region62: #{connnet_forward_pallas.1} parent=59 // pred_check_branch
        %2024 = sbr.rel (%p2022) target = $region64
      $region63: #{connnet_forward_pallas.1} parent=59 // pred_region
        %p2025 = scmp.lt.s32.totalorder %s20, 7
        %s2026 = scalar_select %p2025, %s20, 7
        %s2027 = scalar_lea.vmem %s8, %s2026
      $region64: #{connnet_forward_pallas.1} parent=59 // pred_fallthru
        _
    $region60: #{connnet_forward_pallas.1} parent=5 // pred_fallthru
      _
  $region6: #{connnet_forward_pallas.1} parent=0 // loop_footer
    %s18 = sadd.s32 1, %s14
  $region7: #{connnet_forward_pallas.1} parent=0 // loop_footer_branch
    %13 = sbr.rel target = $region3
  $region8: #{connnet_forward_pallas.1} parent=0 // loop_exit
    _

</llo_original>
